<compile_context>
chip_gen: v5e
topology: v5e:2x2
jax: 0.10.0
libtpu: 0.0.40
codegen_flags: <defaults>
</compile_context>

<pallas_src>
import jax
import jax.numpy as jnp
from jax.experimental import pallas as pl
from jax.experimental.pallas import tpu as pltpu

CHANNEL_LIST = [(0,), (1,), (2,), (4,), (0, 1), (1, 2), (2, 4)]
LOW_CHANNELS = [c for c in CHANNEL_LIST if len(c) == 1]   # [(0,),(1,),(2,),(4,)]
BAND_CHANNELS = [c for c in CHANNEL_LIST if len(c) == 2]  # [(0,1),(1,2),(2,4)]
RADII = sorted({r for c in CHANNEL_LIST for r in c})      # [0, 1, 2, 4]
RAD_IDX = {r: i for i, r in enumerate(RADII)}
NUM_CH = len(CHANNEL_LIST)                                # 7
NUM_ATT = NUM_CH - 1                                      # 6 attended channels (3 low + 3 band)

_VMEM = pl.BlockSpec(memory_space=pltpu.MemorySpace.VMEM)


# ------------------------------ fused Pallas kernel ---------------------------

def _fused_kernel(a_ref, x_ref, wh_ref, bh_ref, watt_ref, wm_ref, bm_ref, expand_ref, o_ref):
    """Whole HybridConv_v2 forward, fully VMEM/register-resident (no scratch).

    a_ref      [N, N]    f32  dense sym-normalized adjacency (dst, src)
    x_ref      [N, D]    f32  node features
    wh_ref     [4D, 8D]  bf16 packed head weights (7 channels + zero pad; band subtraction folded)
    bh_ref     [1, 8D]   f32  packed head biases (last D columns zero)
    watt_ref   [8D, 8]   bf16 packed attention vectors:
                              col0=pre_low, col1..3=ch_low, col4=pre_band, col5..7=ch_band
    wm_ref     [D, D]    bf16 combine-MLP weight (stored as W^T), bm_ref [1, D] f32 bias
    expand_ref [6, 6D]   f32  block-of-ones lane-broadcast matrix (constant, packed at init)
    """
    d = x_ref.shape[1]
    a = a_ref[...]
    x0 = x_ref[...]

    # --- multi-hop propagation (f32 so bf16 rounding does not compound through the chain) ---
    a2 = jnp.dot(a, a, preferred_element_type=jnp.float32)      # A^2 once
    x1 = jnp.dot(a, x0, preferred_element_type=jnp.float32)     # independent, co-issues with A^2
    x2 = jnp.dot(a2, x0, preferred_element_type=jnp.float32)
    x4 = jnp.dot(a2, x2, preferred_element_type=jnp.float32)

    # propagation operand built in registers — no scratch store / reload
    agg = jnp.concatenate([x0, x1, x2, x4], axis=1)              # [N, 4D]

    # TODO(synk): filter_norm_dim in {0,1} (normalize_filter) not emitted; config uses None.

    # --- all 7 channel heads in one MXU pass (activation_att1 = relu), bf16 ops / f32 acc ---
    h = jnp.maximum(
        jnp.dot(agg.astype(jnp.bfloat16), wh_ref[...],
                preferred_element_type=jnp.float32) + bh_ref[...], 0.0)      # [N, 8D] live value

    # --- channel-attention logits for BOTH low and band blocks in one small matmul
    #     (activation_att2 = relu applied per column == per channel dot product) ---
    e = jnp.maximum(
        jnp.dot(h.astype(jnp.bfloat16), watt_ref[...],
                preferred_element_type=jnp.float32), 0.0)                    # [N, 8]

    # biased logits, single exp pass over [N,6], single approx reciprocal over [N,2]
    e_low = e[:, 1:4] + e[:, 0:1]          # low block: pre = channel 0, softmax over 1..3
    e_band = e[:, 5:8] + e[:, 4:5]         # band block: pre = channel (0,1), softmax over 4..6
    m_low = jnp.max(e_low, axis=-1, keepdims=True)
    m_band = jnp.max(e_band, axis=-1, keepdims=True)
    p = jnp.exp(jnp.concatenate([e_low - m_low, e_band - m_band], axis=1))   # [N, 6]
    inv = pl.reciprocal(
        jnp.concatenate([jnp.sum(p[:, 0:3], axis=-1, keepdims=True),
                         jnp.sum(p[:, 3:6], axis=-1, keepdims=True)], axis=1),
        approx=True)                                                         # [N, 2]
    w6 = jnp.concatenate([p[:, 0:3] * inv[:, 0:1], p[:, 3:6] * inv[:, 1:2]], axis=1)  # [N, 6]

    # lane-broadcast the 6 channel weights to 32-lane blocks with one tiny constant MXU matmul,
    # so the weighted combine is ONE wide [N,192] vmul + a block sum (no width-1 lane slices).
    w_wide = jnp.dot(w6, expand_ref[...], preferred_element_type=jnp.float32)  # [N, 6D]
    t = w_wide * h[:, d:(NUM_CH * d)]                                          # [N, 6D]
    bias = (t[:, 0 * d:1 * d] + t[:, 1 * d:2 * d] + t[:, 2 * d:3 * d]          # x_low
            + t[:, 3 * d:4 * d] + t[:, 4 * d:5 * d] + t[:, 5 * d:6 * d])       # + x_band

    # combine_fn == 'att_bias': x (= A^4 x after the hop loop) + (x_low + x_band),
    # then mlp_out = single Linear (depth_mlp = 1, PyG-MLP plain last layer -> no activation).
    xc = x4 + bias
    o_ref[...] = jnp.dot(xc.astype(jnp.bfloat16), wm_ref[...],
                         preferred_element_type=jnp.float32) + bm_ref[...]


# --------------------------- parameter packing (runs ONCE at init) -------------

def pack_params(params, d):
    """Pack head / attention / MLP weights for the fused matmuls. Called once, outside jit."""
    nr = len(RADII)
    wh = jnp.zeros((nr * d, (NUM_CH + 1) * d), jnp.float32)   # pad to 8 blocks -> 256 lanes
    bh = jnp.zeros((1, (NUM_CH + 1) * d), jnp.float32)
    for c, ch in enumerate(CHANNEL_LIST):
        w_t, b = params["head"][ch]                           # W^T [d,d], bias [1,d]
        cs = slice(c * d, (c + 1) * d)
        r0 = RAD_IDX[ch[0]]
        wh = wh.at[r0 * d:(r0 + 1) * d, cs].add(w_t)
        if len(ch) == 2:                                      # band: fold (x_a - x_b) into weights
            r1 = RAD_IDX[ch[1]]
            wh = wh.at[r1 * d:(r1 + 1) * d, cs].add(-w_t)
        bh = bh.at[:, cs].set(b)

    watt = jnp.zeros(((NUM_CH + 1) * d, 8), jnp.float32)
    watt = watt.at[0 * d:1 * d, 0].set(params["att_pre_low"][0])
    for j, c in enumerate((1, 2, 3)):
        watt = watt.at[c * d:(c + 1) * d, 1 + j].set(params["att_channel_low"][0])
    watt = watt.at[4 * d:5 * d, 4].set(params["att_pre_band"][0])
    for j, c in enumerate((4, 5, 6)):
        watt = watt.at[c * d:(c + 1) * d, 5 + j].set(params["att_channel_band"][0])

    # block-of-ones lane-broadcast matrix for the attention-weight expand matmul (exact in f32)
    expand = jnp.kron(jnp.eye(NUM_ATT, dtype=jnp.float32), jnp.ones((1, d), jnp.float32))

    return dict(
        wh=wh.astype(jnp.bfloat16),          # MXU operands stored bf16 (halves their DMA)
        bh=bh,                               # biases added post-accumulation: keep f32
        watt=watt.astype(jnp.bfloat16),
        wm=params["mlp_w"].astype(jnp.bfloat16),
        bm=params["mlp_b"],
        expand=expand,
    )


# ------------------------------------ wrapper -----------------------------------

@jax.jit
def hybrid_conv_forward(x, a_norm, packed):
    n, d = x.shape
    return pl.pallas_call(
        _fused_kernel,
        out_shape=jax.ShapeDtypeStruct((n, d), jnp.float32),
        in_specs=[_VMEM] * 8,
        out_specs=_VMEM,
    )(a_norm, x, packed["wh"], packed["bh"], packed["watt"],
      packed["wm"], packed["bm"], packed["expand"])


# ----------------------- glue: graph norm & parameters -------------------------

def sym_norm_dense(edge_index, num_nodes):
    """Dense equivalent of sym_norm(): remove self loops, add self loops (weight 1),
    edge weight = deg^-1/2[src] * deg^-1/2[dst] (deg from graph w/o self loops), /2."""
    src, dst = edge_index
    a = jnp.zeros((num_nodes, num_nodes), jnp.float32).at[dst, src].set(1.0)
    a = a * (1.0 - jnp.eye(num_nodes, dtype=jnp.float32))        # remove self loops
    deg = a.sum(axis=1)                                           # scatter at edge_index[1]
    dinv = jnp.where(deg > 0, deg ** -0.5, 0.0)
    m = dinv[:, None] * a * dinv[None, :]
    m = m + jnp.eye(num_nodes, dtype=jnp.float32)                 # self-loop weight 1.0
    return m * 0.5                                                # sym_norm returns weight / 2


def init_params(key, d_in, d_out):
    params = {"head": {}}
    keys = jax.random.split(key, 2 * len(CHANNEL_LIST) + 6)
    ki = iter(keys)
    lim = 1.0 / jnp.sqrt(d_in)
    for ch in CHANNEL_LIST:
        w_t = jax.random.uniform(next(ki), (d_in, d_out), jnp.float32, -lim, lim)   # stored W^T
        b = jax.random.uniform(next(ki), (1, d_out), jnp.float32, -lim, lim)
        params["head"][ch] = (w_t, b)
    glim = jnp.sqrt(6.0 / (1 + d_out))                                              # glorot
    params["att_pre_low"] = jax.random.uniform(next(ki), (1, d_out), jnp.float32, -glim, glim)
    params["att_channel_low"] = jax.random.uniform(next(ki), (1, d_out), jnp.float32, -glim, glim)
    params["att_pre_band"] = jax.random.uniform(next(ki), (1, d_out), jnp.float32, -glim, glim)
    params["att_channel_band"] = jax.random.uniform(next(ki), (1, d_out), jnp.float32, -glim, glim)
    mlim = 1.0 / jnp.sqrt(d_out)
    params["mlp_w"] = jax.random.uniform(next(ki), (d_out, d_out), jnp.float32, -mlim, mlim)
    params["mlp_b"] = jax.random.uniform(next(ki), (1, d_out), jnp.float32, -mlim, mlim)
    return params


# ------------------------------ pure-JAX reference -----------------------------

def reference_forward(x, a_norm, params):
    relu = lambda v: jnp.maximum(v, 0.0)
    agg = {0: x}
    xc = x
    for r in range(1, RADII[-1] + 1):
        xc = a_norm @ xc
        if r in RADII:
            agg[r] = xc
    h = {}
    for ch in CHANNEL_LIST:
        w_t, b = params["head"][ch]
        feat = agg[ch[0]] if len(ch) == 1 else agg[ch[0]] - agg[ch[1]]
        h[ch] = relu(feat @ w_t + b)

    def att(h_pre, h_list, a_pre, a_ch):
        e_pre = relu(h_pre @ a_pre[0][:, None])
        e = jnp.stack([relu(hc @ a_ch[0][:, None]) for hc in h_list], 0) + e_pre[None]
        w = jax.nn.softmax(e, axis=0)
        return jnp.sum(w * jnp.stack(h_list, 0), axis=0)

    x_low = att(h[LOW_CHANNELS[0]], [h[c] for c in LOW_CHANNELS[1:]],
                params["att_pre_low"], params["att_channel_low"])
    x_band = att(h[BAND_CHANNELS[0]], [h[c] for c in BAND_CHANNELS],
                 params["att_pre_band"], params["att_channel_band"])
    return (agg[RADII[-1]] + x_low + x_band) @ params["mlp_w"] + params["mlp_b"]


# ----------------------------------- main ---------------------------------------

if __name__ == "__main__":
    N, D_IN, D_OUT = 64, 32, 32   # 'att_bias' combine requires d_in == d_out
    key = jax.random.PRNGKey(0)
    k_x, k_p = jax.random.split(key)
    x = jax.random.normal(k_x, (N, D_IN), jnp.float32)

    # deterministic ring graph with +/-1 and +/-2 neighbours (undirected, no self loops)
    idx = jnp.arange(N)
    src = jnp.concatenate([idx, (idx + 1) % N, idx, (idx + 2) % N])
    dst = jnp.concatenate([(idx + 1) % N, idx, (idx + 2) % N, idx])
    edge_index = jnp.stack([src, dst], axis=0)

    a_norm = sym_norm_dense(edge_index, N)
    params = init_params(k_p, D_IN, D_OUT)
    packed = jax.block_until_ready(pack_params(params, D_IN))   # packed ONCE, not per forward

    out = jax.block_until_ready(hybrid_conv_forward(x, a_norm, packed))
    ref = reference_forward(x, a_norm, params)
    assert out.shape == (N, D_OUT), out.shape
    # bf16 MXU operands (f32 accumulation) + approx reciprocal => ~1e-3-level relative error
    # vs the f32 reference; tolerance relaxed accordingly (use f32 operands for strict parity).
    max_err = float(jnp.max(jnp.abs(out - ref)))
    assert bool(jnp.allclose(out, ref, rtol=1e-2, atol=1e-2)), max_err
    print("KERNEL_OK")
</pallas_src>

<mosaic_0001>
module attributes {stable_mosaic.version = 11 : i64} {
  func.func @_fused_kernel(%arg0: memref<64x64xf32, #tpu.memory_space<vmem>>, %arg1: memref<64x32xf32, #tpu.memory_space<vmem>>, %arg2: memref<128x256xbf16, #tpu.memory_space<vmem>>, %arg3: memref<1x256xf32, #tpu.memory_space<vmem>>, %arg4: memref<256x8xbf16, #tpu.memory_space<vmem>>, %arg5: memref<32x32xbf16, #tpu.memory_space<vmem>>, %arg6: memref<1x32xf32, #tpu.memory_space<vmem>>, %arg7: memref<6x192xf32, #tpu.memory_space<vmem>>, %arg8: memref<64x32xf32, #tpu.memory_space<vmem>>) attributes {dimension_semantics = [], scalar_prefetch = 0 : i64, scratch_operands = 0 : i64, tpu.core_type = #tpu.core_type<tc>} {
    %c0 = arith.constant 0 : index
    %c0_0 = arith.constant 0 : index
    %0 = vector.load %arg0[%c0, %c0_0] : memref<64x64xf32, #tpu.memory_space<vmem>>, vector<64x64xf32>
    %c0_1 = arith.constant 0 : index
    %c0_2 = arith.constant 0 : index
    %1 = vector.load %arg1[%c0_1, %c0_2] : memref<64x32xf32, #tpu.memory_space<vmem>>, vector<64x32xf32>
    %cst = arith.constant dense<0.000000e+00> : vector<64x64xf32>
    %2 = tpu.matmul %0, %0, %cst {dimension_numbers = #tpu.dot_dimension_numbers<[1], [0], [0], [1], [0, 0, 1, 1], [], []>} : vector<64x64xf32>, vector<64x64xf32>, vector<64x64xf32> -> vector<64x64xf32>
    %cst_3 = arith.constant dense<0.000000e+00> : vector<64x32xf32>
    %3 = tpu.matmul %0, %1, %cst_3 {dimension_numbers = #tpu.dot_dimension_numbers<[1], [0], [0], [1], [0, 0, 1, 1], [], []>} : vector<64x64xf32>, vector<64x32xf32>, vector<64x32xf32> -> vector<64x32xf32>
    %cst_4 = arith.constant dense<0.000000e+00> : vector<64x32xf32>
    %4 = tpu.matmul %2, %1, %cst_4 {dimension_numbers = #tpu.dot_dimension_numbers<[1], [0], [0], [1], [0, 0, 1, 1], [], []>} : vector<64x64xf32>, vector<64x32xf32>, vector<64x32xf32> -> vector<64x32xf32>
    %cst_5 = arith.constant dense<0.000000e+00> : vector<64x32xf32>
    %5 = tpu.matmul %2, %4, %cst_5 {dimension_numbers = #tpu.dot_dimension_numbers<[1], [0], [0], [1], [0, 0, 1, 1], [], []>} : vector<64x64xf32>, vector<64x32xf32>, vector<64x32xf32> -> vector<64x32xf32>
    %6 = tpu.concatenate %1, %3, %4, %5 in 1 : vector<64x32xf32>, vector<64x32xf32>, vector<64x32xf32>, vector<64x32xf32> -> vector<64x128xf32>
    %7 = arith.truncf %6 : vector<64x128xf32> to vector<64x128xbf16>
    %c0_6 = arith.constant 0 : index
    %c0_7 = arith.constant 0 : index
    %8 = vector.load %arg2[%c0_6, %c0_7] : memref<128x256xbf16, #tpu.memory_space<vmem>>, vector<128x256xbf16>
    %cst_8 = arith.constant dense<0.000000e+00> : vector<64x256xf32>
    %9 = tpu.matmul %7, %8, %cst_8 {dimension_numbers = #tpu.dot_dimension_numbers<[1], [0], [0], [1], [0, 0, 1, 1], [], []>} : vector<64x128xbf16>, vector<128x256xbf16>, vector<64x256xf32> -> vector<64x256xf32>
    %c0_9 = arith.constant 0 : index
    %c0_10 = arith.constant 0 : index
    %10 = vector.load %arg3[%c0_9, %c0_10] : memref<1x256xf32, #tpu.memory_space<vmem>>, vector<1x256xf32>
    %11 = vector.broadcast %10 : vector<1x256xf32> to vector<64x256xf32>
    %12 = arith.addf %9, %11 : vector<64x256xf32>
    %cst_11 = arith.constant 0.000000e+00 : f32
    %13 = vector.broadcast %cst_11 : f32 to vector<64x256xf32>
    %14 = arith.maximumf %12, %13 : vector<64x256xf32>
    %15 = arith.truncf %14 : vector<64x256xf32> to vector<64x256xbf16>
    %c0_12 = arith.constant 0 : index
    %c0_13 = arith.constant 0 : index
    %16 = vector.load %arg4[%c0_12, %c0_13] : memref<256x8xbf16, #tpu.memory_space<vmem>>, vector<256x8xbf16>
    %cst_14 = arith.constant dense<0.000000e+00> : vector<64x8xf32>
    %17 = tpu.matmul %15, %16, %cst_14 {dimension_numbers = #tpu.dot_dimension_numbers<[1], [0], [0], [1], [0, 0, 1, 1], [], []>} : vector<64x256xbf16>, vector<256x8xbf16>, vector<64x8xf32> -> vector<64x8xf32>
    %cst_15 = arith.constant 0.000000e+00 : f32
    %18 = vector.broadcast %cst_15 : f32 to vector<64x8xf32>
    %19 = arith.maximumf %17, %18 : vector<64x8xf32>
    %20 = vector.extract_strided_slice %19 {offsets = [0, 1], sizes = [64, 3], strides = [1, 1]} : vector<64x8xf32> to vector<64x3xf32>
    %21 = vector.extract_strided_slice %19 {offsets = [0, 0], sizes = [64, 1], strides = [1, 1]} : vector<64x8xf32> to vector<64x1xf32>
    %22 = vector.broadcast %21 : vector<64x1xf32> to vector<64x3xf32>
    %23 = arith.addf %20, %22 : vector<64x3xf32>
    %24 = vector.extract_strided_slice %19 {offsets = [0, 5], sizes = [64, 3], strides = [1, 1]} : vector<64x8xf32> to vector<64x3xf32>
    %25 = vector.extract_strided_slice %19 {offsets = [0, 4], sizes = [64, 1], strides = [1, 1]} : vector<64x8xf32> to vector<64x1xf32>
    %26 = vector.broadcast %25 : vector<64x1xf32> to vector<64x3xf32>
    %27 = arith.addf %24, %26 : vector<64x3xf32>
    %cst_16 = arith.constant dense<0xFF800000> : vector<64xf32>
    %28 = vector.multi_reduction <maximumf>, %23, %cst_16 [1] : vector<64x3xf32> to vector<64xf32>
    %29 = vector.shape_cast %28 : vector<64xf32> to vector<64x1xf32>
    %cst_17 = arith.constant dense<0xFF800000> : vector<64xf32>
    %30 = vector.multi_reduction <maximumf>, %27, %cst_17 [1] : vector<64x3xf32> to vector<64xf32>
    %31 = vector.shape_cast %30 : vector<64xf32> to vector<64x1xf32>
    %32 = vector.broadcast %29 : vector<64x1xf32> to vector<64x3xf32>
    %33 = arith.subf %23, %32 : vector<64x3xf32>
    %34 = vector.broadcast %31 : vector<64x1xf32> to vector<64x3xf32>
    %35 = arith.subf %27, %34 : vector<64x3xf32>
    %36 = tpu.concatenate %33, %35 in 1 : vector<64x3xf32>, vector<64x3xf32> -> vector<64x6xf32>
    %37 = math.exp %36 : vector<64x6xf32>
    %38 = vector.extract_strided_slice %37 {offsets = [0, 0], sizes = [64, 3], strides = [1, 1]} : vector<64x6xf32> to vector<64x3xf32>
    %cst_18 = arith.constant dense<0.000000e+00> : vector<64xf32>
    %39 = vector.multi_reduction <add>, %38, %cst_18 [1] : vector<64x3xf32> to vector<64xf32>
    %40 = vector.shape_cast %39 : vector<64xf32> to vector<64x1xf32>
    %41 = vector.extract_strided_slice %37 {offsets = [0, 3], sizes = [64, 3], strides = [1, 1]} : vector<64x6xf32> to vector<64x3xf32>
    %cst_19 = arith.constant dense<0.000000e+00> : vector<64xf32>
    %42 = vector.multi_reduction <add>, %41, %cst_19 [1] : vector<64x3xf32> to vector<64xf32>
    %43 = vector.shape_cast %42 : vector<64xf32> to vector<64x1xf32>
    %44 = tpu.concatenate %40, %43 in 1 : vector<64x1xf32>, vector<64x1xf32> -> vector<64x2xf32>
    %45 = tpu.reciprocal %44 {approx = true} : vector<64x2xf32> -> vector<64x2xf32>
    %46 = vector.extract_strided_slice %37 {offsets = [0, 0], sizes = [64, 3], strides = [1, 1]} : vector<64x6xf32> to vector<64x3xf32>
    %47 = vector.extract_strided_slice %45 {offsets = [0, 0], sizes = [64, 1], strides = [1, 1]} : vector<64x2xf32> to vector<64x1xf32>
    %48 = vector.broadcast %47 : vector<64x1xf32> to vector<64x3xf32>
    %49 = arith.mulf %46, %48 : vector<64x3xf32>
    %50 = vector.extract_strided_slice %37 {offsets = [0, 3], sizes = [64, 3], strides = [1, 1]} : vector<64x6xf32> to vector<64x3xf32>
    %51 = vector.extract_strided_slice %45 {offsets = [0, 1], sizes = [64, 1], strides = [1, 1]} : vector<64x2xf32> to vector<64x1xf32>
    %52 = vector.broadcast %51 : vector<64x1xf32> to vector<64x3xf32>
    %53 = arith.mulf %50, %52 : vector<64x3xf32>
    %54 = tpu.concatenate %49, %53 in 1 : vector<64x3xf32>, vector<64x3xf32> -> vector<64x6xf32>
    %c0_20 = arith.constant 0 : index
    %c0_21 = arith.constant 0 : index
    %55 = vector.load %arg7[%c0_20, %c0_21] : memref<6x192xf32, #tpu.memory_space<vmem>>, vector<6x192xf32>
    %cst_22 = arith.constant dense<0.000000e+00> : vector<64x192xf32>
    %56 = tpu.matmul %54, %55, %cst_22 {dimension_numbers = #tpu.dot_dimension_numbers<[1], [0], [0], [1], [0, 0, 1, 1], [], []>} : vector<64x6xf32>, vector<6x192xf32>, vector<64x192xf32> -> vector<64x192xf32>
    %57 = vector.extract_strided_slice %14 {offsets = [0, 32], sizes = [64, 192], strides = [1, 1]} : vector<64x256xf32> to vector<64x192xf32>
    %58 = arith.mulf %56, %57 : vector<64x192xf32>
    %59 = vector.extract_strided_slice %58 {offsets = [0, 0], sizes = [64, 32], strides = [1, 1]} : vector<64x192xf32> to vector<64x32xf32>
    %60 = vector.extract_strided_slice %58 {offsets = [0, 32], sizes = [64, 32], strides = [1, 1]} : vector<64x192xf32> to vector<64x32xf32>
    %61 = arith.addf %59, %60 : vector<64x32xf32>
    %62 = vector.extract_strided_slice %58 {offsets = [0, 64], sizes = [64, 32], strides = [1, 1]} : vector<64x192xf32> to vector<64x32xf32>
    %63 = arith.addf %61, %62 : vector<64x32xf32>
    %64 = vector.extract_strided_slice %58 {offsets = [0, 96], sizes = [64, 32], strides = [1, 1]} : vector<64x192xf32> to vector<64x32xf32>
    %65 = arith.addf %63, %64 : vector<64x32xf32>
    %66 = vector.extract_strided_slice %58 {offsets = [0, 128], sizes = [64, 32], strides = [1, 1]} : vector<64x192xf32> to vector<64x32xf32>
    %67 = arith.addf %65, %66 : vector<64x32xf32>
    %68 = vector.extract_strided_slice %58 {offsets = [0, 160], sizes = [64, 32], strides = [1, 1]} : vector<64x192xf32> to vector<64x32xf32>
    %69 = arith.addf %67, %68 : vector<64x32xf32>
    %70 = arith.addf %5, %69 : vector<64x32xf32>
    %71 = arith.truncf %70 : vector<64x32xf32> to vector<64x32xbf16>
    %c0_23 = arith.constant 0 : index
    %c0_24 = arith.constant 0 : index
    %72 = vector.load %arg5[%c0_23, %c0_24] : memref<32x32xbf16, #tpu.memory_space<vmem>>, vector<32x32xbf16>
    %cst_25 = arith.constant dense<0.000000e+00> : vector<64x32xf32>
    %73 = tpu.matmul %71, %72, %cst_25 {dimension_numbers = #tpu.dot_dimension_numbers<[1], [0], [0], [1], [0, 0, 1, 1], [], []>} : vector<64x32xbf16>, vector<32x32xbf16>, vector<64x32xf32> -> vector<64x32xf32>
    %c0_26 = arith.constant 0 : index
    %c0_27 = arith.constant 0 : index
    %74 = vector.load %arg6[%c0_26, %c0_27] : memref<1x32xf32, #tpu.memory_space<vmem>>, vector<1x32xf32>
    %75 = vector.broadcast %74 : vector<1x32xf32> to vector<64x32xf32>
    %76 = arith.addf %73, %75 : vector<64x32xf32>
    %c0_28 = arith.constant 0 : index
    %c0_29 = arith.constant 0 : index
    %77 = vector.load %arg8[%c0_28, %c0_29] : memref<64x32xf32, #tpu.memory_space<vmem>>, vector<64x32xf32>
    tpu.vector_store %arg8[%c0_28, %c0_29], %76 {strides = array<i32>} : memref<64x32xf32, #tpu.memory_space<vmem>>, vector<64x32xf32>,
    return
  }
}

</mosaic_0001>

<llo_original>
// kernel: hybrid_conv_forward.1
$region0: #{hybrid_conv_forward.1}
  #allocation0 [shape = 'u32[]', space=smem, size = 0x4, offset = 0x4, fixed_abs, tag = 'smem constant byte address 0x4 - core index']
  #allocation1 [shape = 'u32[72,128]{1,0:T(1,128)}', space=vmem, size = 0x9000, scoped, tag = 'internal scratch']
  %s0 = inlined_call_operand.vmem [shape: f32[64,64], index: 0, kind: input, shape index: {}]
  %s1 = inlined_call_operand.vmem [shape: f32[64,32], index: 1, kind: input, shape index: {}]
  %s2 = inlined_call_operand.vmem [shape: bf16[128,256], index: 2, kind: input, shape index: {}]
  %s3 = inlined_call_operand.hbm [shape: f32[1,256], index: 3, kind: input, shape index: {}]
  %s4 = inlined_call_operand.vmem [shape: bf16[256,8], index: 4, kind: input, shape index: {}]
  %s5 = inlined_call_operand.vmem [shape: bf16[32,32], index: 5, kind: input, shape index: {}]
  %s6 = inlined_call_operand.vmem [shape: f32[1,32], index: 6, kind: input, shape index: {}]
  %s7 = inlined_call_operand.vmem [shape: f32[6,192], index: 7, kind: input, shape index: {}]
  %s8 = inlined_call_operand.vmem [shape: f32[64,32], index: 8, kind: output, shape index: {}]
  %s9 = sld [smem:[#allocation0]]
  $region46: #{hybrid_conv_forward.1} parent=0
    _
  %s11 = ssub.s32 1, %s9
  %s12 = scalar_select 0, %s11, %s9
  $region1: #{hybrid_conv_forward.1} parent=0
    #allocation2 [shape = 'u8[1024]{0}', space=vmem, size = 0x400, scoped, tag = 'input window, operand 3, single buffered']
    #allocation3 [shape = 's32[1]{0}', space=sflag, size = 0x4, scoped, tag = 'scoped memory for hybrid_conv_forward.1']
    %13 = vsyncpa [#allocation3], 0
    // Predicated region
    $region2: #{hybrid_conv_forward.1} parent=1 // pred_check
      _
    $region3: #{hybrid_conv_forward.1} parent=1 // pred_check_branch
      %15 = sbr.rel (0) target = $region5
    $region4: #{hybrid_conv_forward.1} parent=1 // pred_region
      _
    $region5: #{hybrid_conv_forward.1} parent=1 // pred_fallthru
      _
    // Predicated region
    $region6: #{hybrid_conv_forward.1} parent=1 // pred_check
      _
    $region7: #{hybrid_conv_forward.1} parent=1 // pred_check_branch
      %17 = sbr.rel (0) target = $region9
    $region8: #{hybrid_conv_forward.1} parent=1 // pred_region
      _
    $region9: #{hybrid_conv_forward.1} parent=1 // pred_fallthru
      _
    // Predicated region
    $region10: #{hybrid_conv_forward.1} parent=1 // pred_check
      _
    $region11: #{hybrid_conv_forward.1} parent=1 // pred_check_branch
      %19 = sbr.rel (0) target = $region13
    $region12: #{hybrid_conv_forward.1} parent=1 // pred_region
      _
    $region13: #{hybrid_conv_forward.1} parent=1 // pred_fallthru
      _
    // Predicated region
    $region14: #{hybrid_conv_forward.1} parent=1 // pred_check
      _
    $region15: #{hybrid_conv_forward.1} parent=1 // pred_check_branch
      %21 = sbr.rel (0) target = $region17
    $region16: #{hybrid_conv_forward.1} parent=1 // pred_region
      %23 = vsyncadd [#allocation3], 0
      %s25 = sshll.u32 %s3, 4
      %s26 = int_to_ptr.hbm [resolvable:$true] %s25
      %s27 = sshll.u32 [#allocation2], 4
      %s28 = int_to_ptr.vmem [resolvable:$true] %s27
      %30 = dma.hbm_to_vmem [thread:$0]  %s26, 32, %s28, [#allocation3]
    $region17: #{hybrid_conv_forward.1} parent=1 // pred_fallthru
      _
    // Predicated region
    $region18: #{hybrid_conv_forward.1} parent=1 // pred_check
      _
    $region19: #{hybrid_conv_forward.1} parent=1 // pred_check_branch
      %32 = sbr.rel (0) target = $region21
    $region20: #{hybrid_conv_forward.1} parent=1 // pred_region
      _
    $region21: #{hybrid_conv_forward.1} parent=1 // pred_fallthru
      _
    // Predicated region
    $region22: #{hybrid_conv_forward.1} parent=1 // pred_check
      _
    $region23: #{hybrid_conv_forward.1} parent=1 // pred_check_branch
      %34 = sbr.rel (0) target = $region25
    $region24: #{hybrid_conv_forward.1} parent=1 // pred_region
      _
    $region25: #{hybrid_conv_forward.1} parent=1 // pred_fallthru
      _
    // Predicated region
    $region26: #{hybrid_conv_forward.1} parent=1 // pred_check
      _
    $region27: #{hybrid_conv_forward.1} parent=1 // pred_check_branch
      %36 = sbr.rel (0) target = $region29
    $region28: #{hybrid_conv_forward.1} parent=1 // pred_region
      _
    $region29: #{hybrid_conv_forward.1} parent=1 // pred_fallthru
      _
    // Predicated region
    $region30: #{hybrid_conv_forward.1} parent=1 // pred_check
      _
    $region31: #{hybrid_conv_forward.1} parent=1 // pred_check_branch
      %38 = sbr.rel (0) target = $region33
    $region32: #{hybrid_conv_forward.1} parent=1 // pred_region
      _
    $region33: #{hybrid_conv_forward.1} parent=1 // pred_fallthru
      _
    // Predicated region
    $region34: #{hybrid_conv_forward.1} parent=1 // pred_check
      _
    $region35: #{hybrid_conv_forward.1} parent=1 // pred_check_branch
      %40 = sbr.rel (0) target = $region37
    $region36: #{hybrid_conv_forward.1} parent=1 // pred_region
      %42 = dma.done [#allocation3], 32
    $region37: #{hybrid_conv_forward.1} parent=1 // pred_fallthru
      _
    %v44 = vld [vmem:[%s0] sm:$0xff]
    %v45 = vld [vmem:[%s0 + $0x8] sm:$0xff]
    %v46 = vld [vmem:[%s0 + $0x10] sm:$0xff]
    %v47 = vld [vmem:[%s0 + $0x18] sm:$0xff]
    %v48 = vld [vmem:[%s0 + $0x20] sm:$0xff]
    %v49 = vld [vmem:[%s0 + $0x28] sm:$0xff]
    %v50 = vld [vmem:[%s0 + $0x30] sm:$0xff]
    %v51 = vld [vmem:[%s0 + $0x38] sm:$0xff]
    %v52 = vld [vmem:[%s1] sm:$0xff]
    %v53 = vld [vmem:[%s1 + $0x8] sm:$0xff]
    %v54 = vld [vmem:[%s1 + $0x10] sm:$0xff]
    %v55 = vld [vmem:[%s1 + $0x18] sm:$0xff]
    %v56 = vld [vmem:[%s1 + $0x20] sm:$0xff]
    %v57 = vld [vmem:[%s1 + $0x28] sm:$0xff]
    %v58 = vld [vmem:[%s1 + $0x30] sm:$0xff]
    %v59 = vld [vmem:[%s1 + $0x38] sm:$0xff]
    %vm60 = vcmask 523264
    %v62 = vsel %vm60, %v44, 0
    %v65 = vsel %vm60, %v45, 0
    %v68 = vsel %vm60, %v46, 0
    %v71 = vsel %vm60, %v47, 0
    %v74 = vsel %vm60, %v48, 0
    %v77 = vsel %vm60, %v49, 0
    %v80 = vsel %vm60, %v50, 0
    %v83 = vsel %vm60, %v51, 0
    %85 = vmatpush.msra.mxu0 0.0
    %86 = vmatpush.msra.mxu0 0.0
    %87 = vmatpush.msra.mxu0 0.0
    %88 = vmatpush.msra.mxu0 0.0
    %89 = vmatpush.msra.mxu0 0.0
    %90 = vmatpush.msra.mxu0 0.0
    %91 = vmatpush.msra.mxu0 0.0
    %92 = vmatpush.msra.mxu0 0.0
    %93 = vmatpush.msra.mxu0 %v51
    %94 = vmatpush.msra.mxu0 %v50
    %95 = vmatpush.msra.mxu0 %v49
    %96 = vmatpush.msra.mxu0 %v48
    %97 = vmatpush.msra.mxu0 %v47
    %98 = vmatpush.msra.mxu0 %v46
    %99 = vmatpush.msra.mxu0 %v45
    %100 = vmatpush.msra.mxu0 %v44
    %101 = vmatmul.f32.gmra.mxu0 %v62
    %v102 = vpop.f32.mrf.mxu0
    %v103 = vadd.f32 0.0, %v102
    %104 = vmatmul.f32.gmra.mxu0 %v65
    %v105 = vpop.f32.mrf.mxu0
    %v106 = vadd.f32 0.0, %v105
    %107 = vmatmul.f32.gmra.mxu0 %v68
    %v108 = vpop.f32.mrf.mxu0
    %v109 = vadd.f32 0.0, %v108
    %110 = vmatmul.f32.gmra.mxu0 %v71
    %v111 = vpop.f32.mrf.mxu0
    %v112 = vadd.f32 0.0, %v111
    %113 = vmatmul.f32.gmra.mxu0 %v74
    %v114 = vpop.f32.mrf.mxu0
    %v115 = vadd.f32 0.0, %v114
    %116 = vmatmul.f32.gmra.mxu0 %v77
    %v117 = vpop.f32.mrf.mxu0
    %v118 = vadd.f32 0.0, %v117
    %119 = vmatmul.f32.gmra.mxu0 %v80
    %v120 = vpop.f32.mrf.mxu0
    %v121 = vadd.f32 0.0, %v120
    %122 = vmatmul.f32.gmra.mxu0 %v83
    %v123 = vpop.f32.mrf.mxu0
    %v124 = vadd.f32 0.0, %v123
    %125 = vdwg.mxu0
    %126 = vmatpush.msra.mxu0 0.0
    %127 = vmatpush.msra.mxu0 0.0
    %128 = vmatpush.msra.mxu0 0.0
    %129 = vmatpush.msra.mxu0 0.0
    %130 = vmatpush.msra.mxu0 0.0
    %131 = vmatpush.msra.mxu0 0.0
    %132 = vmatpush.msra.mxu0 0.0
    %133 = vmatpush.msra.mxu0 0.0
    %134 = vmatpush.msra.mxu0 %v59
    %135 = vmatpush.msra.mxu0 %v58
    %136 = vmatpush.msra.mxu0 %v57
    %137 = vmatpush.msra.mxu0 %v56
    %138 = vmatpush.msra.mxu0 %v55
    %139 = vmatpush.msra.mxu0 %v54
    %140 = vmatpush.msra.mxu0 %v53
    %141 = vmatpush.msra.mxu0 %v52
    %142 = vmatmul.f32.gmra.mxu0 %v62
    %v143 = vpop.f32.mrf.mxu0
    %v144 = vadd.f32 0.0, %v143
    %145 = vmatmul.f32.gmra.mxu0 %v65
    %v146 = vpop.f32.mrf.mxu0
    %v147 = vadd.f32 0.0, %v146
    %148 = vmatmul.f32.gmra.mxu0 %v68
    %v149 = vpop.f32.mrf.mxu0
    %v150 = vadd.f32 0.0, %v149
    %151 = vmatmul.f32.gmra.mxu0 %v71
    %v152 = vpop.f32.mrf.mxu0
    %v153 = vadd.f32 0.0, %v152
    %154 = vmatmul.f32.gmra.mxu0 %v74
    %v155 = vpop.f32.mrf.mxu0
    %v156 = vadd.f32 0.0, %v155
    %157 = vmatmul.f32.gmra.mxu0 %v77
    %v158 = vpop.f32.mrf.mxu0
    %v159 = vadd.f32 0.0, %v158
    %160 = vmatmul.f32.gmra.mxu0 %v80
    %v161 = vpop.f32.mrf.mxu0
    %v162 = vadd.f32 0.0, %v161
    %163 = vmatmul.f32.gmra.mxu0 %v83
    %v164 = vpop.f32.mrf.mxu0
    %v165 = vadd.f32 0.0, %v164
    %166 = vdwg.mxu0
    %v168 = vsel %vm60, %v103, 0
    %v171 = vsel %vm60, %v106, 0
    %v174 = vsel %vm60, %v109, 0
    %v177 = vsel %vm60, %v112, 0
    %v180 = vsel %vm60, %v115, 0
    %v183 = vsel %vm60, %v118, 0
    %v186 = vsel %vm60, %v121, 0
    %v189 = vsel %vm60, %v124, 0
    %191 = vmatpush.msra.mxu0 0.0
    %192 = vmatpush.msra.mxu0 0.0
    %193 = vmatpush.msra.mxu0 0.0
    %194 = vmatpush.msra.mxu0 0.0
    %195 = vmatpush.msra.mxu0 0.0
    %196 = vmatpush.msra.mxu0 0.0
    %197 = vmatpush.msra.mxu0 0.0
    %198 = vmatpush.msra.mxu0 0.0
    %199 = vmatpush.msra.mxu0 %v59
    %200 = vmatpush.msra.mxu0 %v58
    %201 = vmatpush.msra.mxu0 %v57
    %202 = vmatpush.msra.mxu0 %v56
    %203 = vmatpush.msra.mxu0 %v55
    %204 = vmatpush.msra.mxu0 %v54
    %205 = vmatpush.msra.mxu0 %v53
    %206 = vmatpush.msra.mxu0 %v52
    %207 = vmatmul.f32.gmra.mxu0 %v168
    %v208 = vpop.f32.mrf.mxu0
    %v209 = vadd.f32 0.0, %v208
    %210 = vmatmul.f32.gmra.mxu0 %v171
    %v211 = vpop.f32.mrf.mxu0
    %v212 = vadd.f32 0.0, %v211
    %213 = vmatmul.f32.gmra.mxu0 %v174
    %v214 = vpop.f32.mrf.mxu0
    %v215 = vadd.f32 0.0, %v214
    %216 = vmatmul.f32.gmra.mxu0 %v177
    %v217 = vpop.f32.mrf.mxu0
    %v218 = vadd.f32 0.0, %v217
    %219 = vmatmul.f32.gmra.mxu0 %v180
    %v220 = vpop.f32.mrf.mxu0
    %v221 = vadd.f32 0.0, %v220
    %222 = vmatmul.f32.gmra.mxu0 %v183
    %v223 = vpop.f32.mrf.mxu0
    %v224 = vadd.f32 0.0, %v223
    %225 = vmatmul.f32.gmra.mxu0 %v186
    %v226 = vpop.f32.mrf.mxu0
    %v227 = vadd.f32 0.0, %v226
    %228 = vmatmul.f32.gmra.mxu0 %v189
    %v229 = vpop.f32.mrf.mxu0
    %v230 = vadd.f32 0.0, %v229
    %231 = vdwg.mxu0
    %232 = vmatpush.msra.mxu0 0.0
    %233 = vmatpush.msra.mxu0 0.0
    %234 = vmatpush.msra.mxu0 0.0
    %235 = vmatpush.msra.mxu0 0.0
    %236 = vmatpush.msra.mxu0 0.0
    %237 = vmatpush.msra.mxu0 0.0
    %238 = vmatpush.msra.mxu0 0.0
    %239 = vmatpush.msra.mxu0 0.0
    %240 = vmatpush.msra.mxu0 %v230
    %241 = vmatpush.msra.mxu0 %v227
    %242 = vmatpush.msra.mxu0 %v224
    %243 = vmatpush.msra.mxu0 %v221
    %244 = vmatpush.msra.mxu0 %v218
    %245 = vmatpush.msra.mxu0 %v215
    %246 = vmatpush.msra.mxu0 %v212
    %247 = vmatpush.msra.mxu0 %v209
    %248 = vmatmul.f32.gmra.mxu0 %v168
    %v249 = vpop.f32.mrf.mxu0
    %v250 = vadd.f32 0.0, %v249
    %251 = vmatmul.f32.gmra.mxu0 %v171
    %v252 = vpop.f32.mrf.mxu0
    %v253 = vadd.f32 0.0, %v252
    %254 = vmatmul.f32.gmra.mxu0 %v174
    %v255 = vpop.f32.mrf.mxu0
    %v256 = vadd.f32 0.0, %v255
    %257 = vmatmul.f32.gmra.mxu0 %v177
    %v258 = vpop.f32.mrf.mxu0
    %v259 = vadd.f32 0.0, %v258
    %260 = vmatmul.f32.gmra.mxu0 %v180
    %v261 = vpop.f32.mrf.mxu0
    %v262 = vadd.f32 0.0, %v261
    %263 = vmatmul.f32.gmra.mxu0 %v183
    %v264 = vpop.f32.mrf.mxu0
    %v265 = vadd.f32 0.0, %v264
    %266 = vmatmul.f32.gmra.mxu0 %v186
    %v267 = vpop.f32.mrf.mxu0
    %v268 = vadd.f32 0.0, %v267
    %269 = vmatmul.f32.gmra.mxu0 %v189
    %v270 = vpop.f32.mrf.mxu0
    %v271 = vadd.f32 0.0, %v270
    %272 = vdwg.mxu0
    %281 = vrot.lane.b32.xlu0 %v144, 32
    %v282 = vpop.permute.xlu0 %281
    %283 = vrot.lane.b32.xlu0 %v147, 32
    %v284 = vpop.permute.xlu0 %283
    %285 = vrot.lane.b32.xlu0 %v150, 32
    %v286 = vpop.permute.xlu0 %285
    %287 = vrot.lane.b32.xlu0 %v153, 32
    %v288 = vpop.permute.xlu0 %287
    %289 = vrot.lane.b32.xlu0 %v156, 32
    %v290 = vpop.permute.xlu0 %289
    %291 = vrot.lane.b32.xlu0 %v159, 32
    %v292 = vpop.permute.xlu0 %291
    %293 = vrot.lane.b32.xlu0 %v162, 32
    %v294 = vpop.permute.xlu0 %293
    %295 = vrot.lane.b32.xlu0 %v165, 32
    %v296 = vpop.permute.xlu0 %295
    %313 = vrot.lane.b32.xlu0 %v209, 64
    %v314 = vpop.permute.xlu0 %313
    %315 = vrot.lane.b32.xlu0 %v212, 64
    %v316 = vpop.permute.xlu0 %315
    %317 = vrot.lane.b32.xlu0 %v215, 64
    %v318 = vpop.permute.xlu0 %317
    %319 = vrot.lane.b32.xlu0 %v218, 64
    %v320 = vpop.permute.xlu0 %319
    %321 = vrot.lane.b32.xlu0 %v221, 64
    %v322 = vpop.permute.xlu0 %321
    %323 = vrot.lane.b32.xlu0 %v224, 64
    %v324 = vpop.permute.xlu0 %323
    %325 = vrot.lane.b32.xlu0 %v227, 64
    %v326 = vpop.permute.xlu0 %325
    %327 = vrot.lane.b32.xlu0 %v230, 64
    %v328 = vpop.permute.xlu0 %327
    %345 = vrot.lane.b32.xlu0 %v250, 96
    %v346 = vpop.permute.xlu0 %345
    %347 = vrot.lane.b32.xlu0 %v253, 96
    %v348 = vpop.permute.xlu0 %347
    %349 = vrot.lane.b32.xlu0 %v256, 96
    %v350 = vpop.permute.xlu0 %349
    %351 = vrot.lane.b32.xlu0 %v259, 96
    %v352 = vpop.permute.xlu0 %351
    %353 = vrot.lane.b32.xlu0 %v262, 96
    %v354 = vpop.permute.xlu0 %353
    %355 = vrot.lane.b32.xlu0 %v265, 96
    %v356 = vpop.permute.xlu0 %355
    %357 = vrot.lane.b32.xlu0 %v268, 96
    %v358 = vpop.permute.xlu0 %357
    %359 = vrot.lane.b32.xlu0 %v271, 96
    %v360 = vpop.permute.xlu0 %359
    %vm369 = vcmask 261120
    %v370 = vsel %vm369, %v52, %v282
    %v371 = vsel %vm369, %v53, %v284
    %v372 = vsel %vm369, %v54, %v286
    %v373 = vsel %vm369, %v55, %v288
    %v374 = vsel %vm369, %v56, %v290
    %v375 = vsel %vm369, %v57, %v292
    %v376 = vsel %vm369, %v58, %v294
    %v377 = vsel %vm369, %v59, %v296
    %v378 = vsel %vm60, %v370, %v314
    %v379 = vsel %vm60, %v371, %v316
    %v380 = vsel %vm60, %v372, %v318
    %v381 = vsel %vm60, %v373, %v320
    %v382 = vsel %vm60, %v374, %v322
    %v383 = vsel %vm60, %v375, %v324
    %v384 = vsel %vm60, %v376, %v326
    %v385 = vsel %vm60, %v377, %v328
    %vm386 = vcmask 785408
    %v387 = vsel %vm386, %v378, %v346
    %v388 = vsel %vm386, %v379, %v348
    %v389 = vsel %vm386, %v380, %v350
    %v390 = vsel %vm386, %v381, %v352
    %v391 = vsel %vm386, %v382, %v354
    %v392 = vsel %vm386, %v383, %v356
    %v393 = vsel %vm386, %v384, %v358
    %v394 = vsel %vm386, %v385, %v360
    %v395 = vpack.c.bf16 %v388, %v387
    %v396 = vpack.c.bf16 %v390, %v389
    %v397 = vpack.c.bf16 %v392, %v391
    %v398 = vpack.c.bf16 %v394, %v393
    %v399 = vld [vmem:[%s2] sm:$0xff]
    %v400 = vld [vmem:[%s2 + $0x8] sm:$0xff]
    %v401 = vld [vmem:[%s2 + $0x10] sm:$0xff]
    %v402 = vld [vmem:[%s2 + $0x18] sm:$0xff]
    %v403 = vld [vmem:[%s2 + $0x20] sm:$0xff]
    %v404 = vld [vmem:[%s2 + $0x28] sm:$0xff]
    %v405 = vld [vmem:[%s2 + $0x30] sm:$0xff]
    %v406 = vld [vmem:[%s2 + $0x38] sm:$0xff]
    %v407 = vld [vmem:[%s2 + $0x40] sm:$0xff]
    %v408 = vld [vmem:[%s2 + $0x48] sm:$0xff]
    %v409 = vld [vmem:[%s2 + $0x50] sm:$0xff]
    %v410 = vld [vmem:[%s2 + $0x58] sm:$0xff]
    %v411 = vld [vmem:[%s2 + $0x60] sm:$0xff]
    %v412 = vld [vmem:[%s2 + $0x68] sm:$0xff]
    %v413 = vld [vmem:[%s2 + $0x70] sm:$0xff]
    %v414 = vld [vmem:[%s2 + $0x78] sm:$0xff]
    %v415 = vld [vmem:[#allocation2] sm:$0x3]
    %v417 = vperm.slane %v415, 0
    %v418 = vperm.slane %v415, 1
    %v437 = vunpack.c.l.b16 %v399
    %v438 = vunpack.c.h.b16 %v399
    %v439 = vunpack.c.l.b16 %v400
    %v440 = vunpack.c.h.b16 %v400
    %v441 = vunpack.c.l.b16 %v401
    %v442 = vunpack.c.h.b16 %v401
    %v443 = vunpack.c.l.b16 %v402
    %v444 = vunpack.c.h.b16 %v402
    %v445 = vunpack.c.l.b16 %v403
    %v446 = vunpack.c.h.b16 %v403
    %v447 = vunpack.c.l.b16 %v404
    %v448 = vunpack.c.h.b16 %v404
    %v449 = vunpack.c.l.b16 %v405
    %v450 = vunpack.c.h.b16 %v405
    %v451 = vunpack.c.l.b16 %v406
    %v452 = vunpack.c.h.b16 %v406
    %v453 = vunpack.c.l.b16 %v407
    %v454 = vunpack.c.h.b16 %v407
    %v455 = vunpack.c.l.b16 %v408
    %v456 = vunpack.c.h.b16 %v408
    %v457 = vunpack.c.l.b16 %v409
    %v458 = vunpack.c.h.b16 %v409
    %v459 = vunpack.c.l.b16 %v410
    %v460 = vunpack.c.h.b16 %v410
    %v461 = vunpack.c.l.b16 %v411
    %v462 = vunpack.c.h.b16 %v411
    %v463 = vunpack.c.l.b16 %v412
    %v464 = vunpack.c.h.b16 %v412
    %v465 = vunpack.c.l.b16 %v413
    %v466 = vunpack.c.h.b16 %v413
    %v467 = vunpack.c.l.b16 %v414
    %v468 = vunpack.c.h.b16 %v414
    %v469 = vpack.c.b16 %v439, %v437
    %v470 = vpack.c.b16 %v440, %v438
    %v471 = vpack.c.b16 %v443, %v441
    %v472 = vpack.c.b16 %v444, %v442
    %v473 = vpack.c.b16 %v447, %v445
    %v474 = vpack.c.b16 %v448, %v446
    %v475 = vpack.c.b16 %v451, %v449
    %v476 = vpack.c.b16 %v452, %v450
    %v477 = vpack.c.b16 %v455, %v453
    %v478 = vpack.c.b16 %v456, %v454
    %v479 = vpack.c.b16 %v459, %v457
    %v480 = vpack.c.b16 %v460, %v458
    %v481 = vpack.c.b16 %v463, %v461
    %v482 = vpack.c.b16 %v464, %v462
    %v483 = vpack.c.b16 %v467, %v465
    %v484 = vpack.c.b16 %v468, %v466
    %501 = vmatpush.bf16.msra.mxu0 %v483
    %502 = vmatpush.bf16.msra.mxu0 %v481
    %503 = vmatpush.bf16.msra.mxu0 %v479
    %504 = vmatpush.bf16.msra.mxu0 %v477
    %505 = vmatpush.bf16.msra.mxu0 %v475
    %506 = vmatpush.bf16.msra.mxu0 %v473
    %507 = vmatpush.bf16.msra.mxu0 %v471
    %508 = vmatpush.bf16.msra.mxu0 %v469
    %509 = vmatmul.bf16.gmra.mxu0 %v395
    %v510 = vpop.f32.mrf.mxu0
    %v511 = vadd.f32 %v417, %v510
    %v512 = vpop.f32.mrf.mxu0
    %v513 = vadd.f32 %v417, %v512
    %514 = vmatmul.bf16.gmra.mxu0 %v396
    %v515 = vpop.f32.mrf.mxu0
    %v516 = vadd.f32 %v417, %v515
    %v517 = vpop.f32.mrf.mxu0
    %v518 = vadd.f32 %v417, %v517
    %519 = vmatmul.bf16.gmra.mxu0 %v397
    %v520 = vpop.f32.mrf.mxu0
    %v521 = vadd.f32 %v417, %v520
    %v522 = vpop.f32.mrf.mxu0
    %v523 = vadd.f32 %v417, %v522
    %524 = vmatmul.bf16.gmra.mxu0 %v398
    %v525 = vpop.f32.mrf.mxu0
    %v526 = vadd.f32 %v417, %v525
    %v527 = vpop.f32.mrf.mxu0
    %v528 = vadd.f32 %v417, %v527
    %529 = vdwg.mxu0
    %530 = vmatpush.bf16.msra.mxu0 %v484
    %531 = vmatpush.bf16.msra.mxu0 %v482
    %532 = vmatpush.bf16.msra.mxu0 %v480
    %533 = vmatpush.bf16.msra.mxu0 %v478
    %534 = vmatpush.bf16.msra.mxu0 %v476
    %535 = vmatpush.bf16.msra.mxu0 %v474
    %536 = vmatpush.bf16.msra.mxu0 %v472
    %537 = vmatpush.bf16.msra.mxu0 %v470
    %538 = vmatmul.bf16.gmra.mxu0 %v395
    %v539 = vpop.f32.mrf.mxu0
    %v540 = vadd.f32 %v418, %v539
    %v541 = vpop.f32.mrf.mxu0
    %v542 = vadd.f32 %v418, %v541
    %543 = vmatmul.bf16.gmra.mxu0 %v396
    %v544 = vpop.f32.mrf.mxu0
    %v545 = vadd.f32 %v418, %v544
    %v546 = vpop.f32.mrf.mxu0
    %v547 = vadd.f32 %v418, %v546
    %548 = vmatmul.bf16.gmra.mxu0 %v397
    %v549 = vpop.f32.mrf.mxu0
    %v550 = vadd.f32 %v418, %v549
    %v551 = vpop.f32.mrf.mxu0
    %v552 = vadd.f32 %v418, %v551
    %553 = vmatmul.bf16.gmra.mxu0 %v398
    %v554 = vpop.f32.mrf.mxu0
    %v555 = vadd.f32 %v418, %v554
    %v556 = vpop.f32.mrf.mxu0
    %v557 = vadd.f32 %v418, %v556
    %558 = vdwg.mxu0
    %v559 = vmax.f32 %v511, 0.0
    %v560 = vmax.f32 %v540, 0.0
    %v561 = vmax.f32 %v513, 0.0
    %v562 = vmax.f32 %v542, 0.0
    %v563 = vmax.f32 %v516, 0.0
    %v564 = vmax.f32 %v545, 0.0
    %v565 = vmax.f32 %v518, 0.0
    %v566 = vmax.f32 %v547, 0.0
    %v567 = vmax.f32 %v521, 0.0
    %v568 = vmax.f32 %v550, 0.0
    %v569 = vmax.f32 %v523, 0.0
    %v570 = vmax.f32 %v552, 0.0
    %v571 = vmax.f32 %v526, 0.0
    %v572 = vmax.f32 %v555, 0.0
    %v573 = vmax.f32 %v528, 0.0
    %v574 = vmax.f32 %v557, 0.0
    %v575 = vpack.c.bf16 %v561, %v559
    %v576 = vpack.c.bf16 %v562, %v560
    %v577 = vpack.c.bf16 %v565, %v563
    %v578 = vpack.c.bf16 %v566, %v564
    %v579 = vpack.c.bf16 %v569, %v567
    %v580 = vpack.c.bf16 %v570, %v568
    %v581 = vpack.c.bf16 %v573, %v571
    %v582 = vpack.c.bf16 %v574, %v572
    %v583 = vld [vmem:[%s4] sm:$0xf]
    %v584 = vld [vmem:[%s4 + $0x4] sm:$0xf]
    %v585 = vld [vmem:[%s4 + $0x8] sm:$0xf]
    %v586 = vld [vmem:[%s4 + $0xc] sm:$0xf]
    %v587 = vld [vmem:[%s4 + $0x10] sm:$0xf]
    %v588 = vld [vmem:[%s4 + $0x14] sm:$0xf]
    %v589 = vld [vmem:[%s4 + $0x18] sm:$0xf]
    %v590 = vld [vmem:[%s4 + $0x1c] sm:$0xf]
    %v591 = vld [vmem:[%s4 + $0x20] sm:$0xf]
    %v592 = vld [vmem:[%s4 + $0x24] sm:$0xf]
    %v593 = vld [vmem:[%s4 + $0x28] sm:$0xf]
    %v594 = vld [vmem:[%s4 + $0x2c] sm:$0xf]
    %v595 = vld [vmem:[%s4 + $0x30] sm:$0xf]
    %v596 = vld [vmem:[%s4 + $0x34] sm:$0xf]
    %v597 = vld [vmem:[%s4 + $0x38] sm:$0xf]
    %v598 = vld [vmem:[%s4 + $0x3c] sm:$0xf]
    %v599 = vld [vmem:[%s4 + $0x40] sm:$0xf]
    %v600 = vld [vmem:[%s4 + $0x44] sm:$0xf]
    %v601 = vld [vmem:[%s4 + $0x48] sm:$0xf]
    %v602 = vld [vmem:[%s4 + $0x4c] sm:$0xf]
    %v603 = vld [vmem:[%s4 + $0x50] sm:$0xf]
    %v604 = vld [vmem:[%s4 + $0x54] sm:$0xf]
    %v605 = vld [vmem:[%s4 + $0x58] sm:$0xf]
    %v606 = vld [vmem:[%s4 + $0x5c] sm:$0xf]
    %v607 = vld [vmem:[%s4 + $0x60] sm:$0xf]
    %v608 = vld [vmem:[%s4 + $0x64] sm:$0xf]
    %v609 = vld [vmem:[%s4 + $0x68] sm:$0xf]
    %v610 = vld [vmem:[%s4 + $0x6c] sm:$0xf]
    %v611 = vld [vmem:[%s4 + $0x70] sm:$0xf]
    %v612 = vld [vmem:[%s4 + $0x74] sm:$0xf]
    %v613 = vld [vmem:[%s4 + $0x78] sm:$0xf]
    %v614 = vld [vmem:[%s4 + $0x7c] sm:$0xf]
    %v647 = vunpack.c.l.b16 %v583
    %v648 = vunpack.c.l.b16 %v584
    %v649 = vunpack.c.l.b16 %v585
    %v650 = vunpack.c.l.b16 %v586
    %v651 = vunpack.c.l.b16 %v587
    %v652 = vunpack.c.l.b16 %v588
    %v653 = vunpack.c.l.b16 %v589
    %v654 = vunpack.c.l.b16 %v590
    %v655 = vunpack.c.l.b16 %v591
    %v656 = vunpack.c.l.b16 %v592
    %v657 = vunpack.c.l.b16 %v593
    %v658 = vunpack.c.l.b16 %v594
    %v659 = vunpack.c.l.b16 %v595
    %v660 = vunpack.c.l.b16 %v596
    %v661 = vunpack.c.l.b16 %v597
    %v662 = vunpack.c.l.b16 %v598
    %v663 = vunpack.c.l.b16 %v599
    %v664 = vunpack.c.l.b16 %v600
    %v665 = vunpack.c.l.b16 %v601
    %v666 = vunpack.c.l.b16 %v602
    %v667 = vunpack.c.l.b16 %v603
    %v668 = vunpack.c.l.b16 %v604
    %v669 = vunpack.c.l.b16 %v605
    %v670 = vunpack.c.l.b16 %v606
    %v671 = vunpack.c.l.b16 %v607
    %v672 = vunpack.c.l.b16 %v608
    %v673 = vunpack.c.l.b16 %v609
    %v674 = vunpack.c.l.b16 %v610
    %v675 = vunpack.c.l.b16 %v611
    %v676 = vunpack.c.l.b16 %v612
    %v677 = vunpack.c.l.b16 %v613
    %v678 = vunpack.c.l.b16 %v614
    %v679 = vpack.c.b16 %v648, %v647
    %v680 = vpack.c.b16 %v650, %v649
    %v681 = vpack.c.b16 %v652, %v651
    %v682 = vpack.c.b16 %v654, %v653
    %v683 = vpack.c.b16 %v656, %v655
    %v684 = vpack.c.b16 %v658, %v657
    %v685 = vpack.c.b16 %v660, %v659
    %v686 = vpack.c.b16 %v662, %v661
    %v687 = vpack.c.b16 %v664, %v663
    %v688 = vpack.c.b16 %v666, %v665
    %v689 = vpack.c.b16 %v668, %v667
    %v690 = vpack.c.b16 %v670, %v669
    %v691 = vpack.c.b16 %v672, %v671
    %v692 = vpack.c.b16 %v674, %v673
    %v693 = vpack.c.b16 %v676, %v675
    %v694 = vpack.c.b16 %v678, %v677
    %711 = vmatpush.bf16.msra.mxu0 %v686
    %712 = vmatpush.bf16.msra.mxu0 %v685
    %713 = vmatpush.bf16.msra.mxu0 %v684
    %714 = vmatpush.bf16.msra.mxu0 %v683
    %715 = vmatpush.bf16.msra.mxu0 %v682
    %716 = vmatpush.bf16.msra.mxu0 %v681
    %717 = vmatpush.bf16.msra.mxu0 %v680
    %718 = vmatpush.bf16.msra.mxu0 %v679
    %719 = vmatmul.bf16.gmra.mxu0 %v575
    %v720 = vpop.f32.mrf.mxu0
    %v721 = vadd.f32 0.0, %v720
    %v722 = vpop.f32.mrf.mxu0
    %v723 = vadd.f32 0.0, %v722
    %724 = vmatmul.bf16.gmra.mxu0 %v577
    %v725 = vpop.f32.mrf.mxu0
    %v726 = vadd.f32 0.0, %v725
    %v727 = vpop.f32.mrf.mxu0
    %v728 = vadd.f32 0.0, %v727
    %729 = vmatmul.bf16.gmra.mxu0 %v579
    %v730 = vpop.f32.mrf.mxu0
    %v731 = vadd.f32 0.0, %v730
    %v732 = vpop.f32.mrf.mxu0
    %v733 = vadd.f32 0.0, %v732
    %734 = vmatmul.bf16.gmra.mxu0 %v581
    %v735 = vpop.f32.mrf.mxu0
    %v736 = vadd.f32 0.0, %v735
    %v737 = vpop.f32.mrf.mxu0
    %v738 = vadd.f32 0.0, %v737
    %739 = vdwg.mxu0
    %740 = vmatpush.bf16.msra.mxu0 %v694
    %741 = vmatpush.bf16.msra.mxu0 %v693
    %742 = vmatpush.bf16.msra.mxu0 %v692
    %743 = vmatpush.bf16.msra.mxu0 %v691
    %744 = vmatpush.bf16.msra.mxu0 %v690
    %745 = vmatpush.bf16.msra.mxu0 %v689
    %746 = vmatpush.bf16.msra.mxu0 %v688
    %747 = vmatpush.bf16.msra.mxu0 %v687
    %748 = vmatmul.bf16.gmra.mxu0 %v576
    %v749 = vpop.f32.mrf.mxu0
    %v750 = vadd.f32 %v721, %v749
    %v751 = vpop.f32.mrf.mxu0
    %v752 = vadd.f32 %v723, %v751
    %753 = vmatmul.bf16.gmra.mxu0 %v578
    %v754 = vpop.f32.mrf.mxu0
    %v755 = vadd.f32 %v726, %v754
    %v756 = vpop.f32.mrf.mxu0
    %v757 = vadd.f32 %v728, %v756
    %758 = vmatmul.bf16.gmra.mxu0 %v580
    %v759 = vpop.f32.mrf.mxu0
    %v760 = vadd.f32 %v731, %v759
    %v761 = vpop.f32.mrf.mxu0
    %v762 = vadd.f32 %v733, %v761
    %763 = vmatmul.bf16.gmra.mxu0 %v582
    %v764 = vpop.f32.mrf.mxu0
    %v765 = vadd.f32 %v736, %v764
    %v766 = vpop.f32.mrf.mxu0
    %v767 = vadd.f32 %v738, %v766
    %768 = vdwg.mxu0
    %v769 = vmax.f32 %v750, 0.0
    %v770 = vmax.f32 %v752, 0.0
    %v771 = vmax.f32 %v755, 0.0
    %v772 = vmax.f32 %v757, 0.0
    %v773 = vmax.f32 %v760, 0.0
    %v774 = vmax.f32 %v762, 0.0
    %v775 = vmax.f32 %v765, 0.0
    %v776 = vmax.f32 %v767, 0.0
    %778 = vset.pattern.permute.xlu0 0
    %779 = vperm.xlu0 %778, %v769
    %v780 = vpop.permute.xlu0 %779
    %783 = vset.pattern.permute.xlu0 0
    %784 = vperm.xlu0 %783, %v770
    %v785 = vpop.permute.xlu0 %784
    %788 = vset.pattern.permute.xlu0 0
    %789 = vperm.xlu0 %788, %v771
    %v790 = vpop.permute.xlu0 %789
    %793 = vset.pattern.permute.xlu0 0
    %794 = vperm.xlu0 %793, %v772
    %v795 = vpop.permute.xlu0 %794
    %798 = vset.pattern.permute.xlu0 0
    %799 = vperm.xlu0 %798, %v773
    %v800 = vpop.permute.xlu0 %799
    %803 = vset.pattern.permute.xlu0 0
    %804 = vperm.xlu0 %803, %v774
    %v805 = vpop.permute.xlu0 %804
    %808 = vset.pattern.permute.xlu0 0
    %809 = vperm.xlu0 %808, %v775
    %v810 = vpop.permute.xlu0 %809
    %813 = vset.pattern.permute.xlu0 0
    %814 = vperm.xlu0 %813, %v776
    %v815 = vpop.permute.xlu0 %814
    %v817 = vadd.f32 %v769, %v780
    %v818 = vadd.f32 %v770, %v785
    %v819 = vadd.f32 %v771, %v790
    %v820 = vadd.f32 %v772, %v795
    %v821 = vadd.f32 %v773, %v800
    %v822 = vadd.f32 %v774, %v805
    %v823 = vadd.f32 %v775, %v810
    %v824 = vadd.f32 %v776, %v815
    %825 = vset.pattern.permute.xlu0 4
    %826 = vperm.xlu0 %825, %v769
    %v827 = vpop.permute.xlu0 %826
    %829 = vset.pattern.permute.xlu0 4
    %830 = vperm.xlu0 %829, %v770
    %v831 = vpop.permute.xlu0 %830
    %833 = vset.pattern.permute.xlu0 4
    %834 = vperm.xlu0 %833, %v771
    %v835 = vpop.permute.xlu0 %834
    %837 = vset.pattern.permute.xlu0 4
    %838 = vperm.xlu0 %837, %v772
    %v839 = vpop.permute.xlu0 %838
    %841 = vset.pattern.permute.xlu0 4
    %842 = vperm.xlu0 %841, %v773
    %v843 = vpop.permute.xlu0 %842
    %845 = vset.pattern.permute.xlu0 4
    %846 = vperm.xlu0 %845, %v774
    %v847 = vpop.permute.xlu0 %846
    %849 = vset.pattern.permute.xlu0 4
    %850 = vperm.xlu0 %849, %v775
    %v851 = vpop.permute.xlu0 %850
    %853 = vset.pattern.permute.xlu0 4
    %854 = vperm.xlu0 %853, %v776
    %v855 = vpop.permute.xlu0 %854
    %v857 = vadd.f32 %v769, %v827
    %v858 = vadd.f32 %v770, %v831
    %v859 = vadd.f32 %v771, %v835
    %v860 = vadd.f32 %v772, %v839
    %v861 = vadd.f32 %v773, %v843
    %v862 = vadd.f32 %v774, %v847
    %v863 = vadd.f32 %v775, %v851
    %v864 = vadd.f32 %v776, %v855
    %vm865 = vcmask 31752
    %v866 = vsel %vm865, %v817, -inf
    %867 = vmax.xlane.f32.xlu0 %v866
    %v868 = vpop.xlane.xlu0 %867
    %v869 = vsel %vm865, %v818, -inf
    %870 = vmax.xlane.f32.xlu0 %v869
    %v871 = vpop.xlane.xlu0 %870
    %v872 = vsel %vm865, %v819, -inf
    %873 = vmax.xlane.f32.xlu0 %v872
    %v874 = vpop.xlane.xlu0 %873
    %v875 = vsel %vm865, %v820, -inf
    %876 = vmax.xlane.f32.xlu0 %v875
    %v877 = vpop.xlane.xlu0 %876
    %v878 = vsel %vm865, %v821, -inf
    %879 = vmax.xlane.f32.xlu0 %v878
    %v880 = vpop.xlane.xlu0 %879
    %v881 = vsel %vm865, %v822, -inf
    %882 = vmax.xlane.f32.xlu0 %v881
    %v883 = vpop.xlane.xlu0 %882
    %v884 = vsel %vm865, %v823, -inf
    %885 = vmax.xlane.f32.xlu0 %v884
    %v886 = vpop.xlane.xlu0 %885
    %v887 = vsel %vm865, %v824, -inf
    %888 = vmax.xlane.f32.xlu0 %v887
    %v889 = vpop.xlane.xlu0 %888
    %vm890 = vcmask 64552
    %v891 = vsel %vm890, %v857, -inf
    %892 = vmax.xlane.f32.xlu0 %v891
    %v893 = vpop.xlane.xlu0 %892
    %v894 = vsel %vm890, %v858, -inf
    %895 = vmax.xlane.f32.xlu0 %v894
    %v896 = vpop.xlane.xlu0 %895
    %v897 = vsel %vm890, %v859, -inf
    %898 = vmax.xlane.f32.xlu0 %v897
    %v899 = vpop.xlane.xlu0 %898
    %v900 = vsel %vm890, %v860, -inf
    %901 = vmax.xlane.f32.xlu0 %v900
    %v902 = vpop.xlane.xlu0 %901
    %v903 = vsel %vm890, %v861, -inf
    %904 = vmax.xlane.f32.xlu0 %v903
    %v905 = vpop.xlane.xlu0 %904
    %v906 = vsel %vm890, %v862, -inf
    %907 = vmax.xlane.f32.xlu0 %v906
    %v908 = vpop.xlane.xlu0 %907
    %v909 = vsel %vm890, %v863, -inf
    %910 = vmax.xlane.f32.xlu0 %v909
    %v911 = vpop.xlane.xlu0 %910
    %v912 = vsel %vm890, %v864, -inf
    %913 = vmax.xlane.f32.xlu0 %v912
    %v914 = vpop.xlane.xlu0 %913
    %v915 = vsub.f32 %v817, %v868
    %v916 = vsub.f32 %v818, %v871
    %v917 = vsub.f32 %v819, %v874
    %v918 = vsub.f32 %v820, %v877
    %v919 = vsub.f32 %v821, %v880
    %v920 = vsub.f32 %v822, %v883
    %v921 = vsub.f32 %v823, %v886
    %v922 = vsub.f32 %v824, %v889
    %v923 = vsub.f32 %v857, %v893
    %v924 = vsub.f32 %v858, %v896
    %v925 = vsub.f32 %v859, %v899
    %v926 = vsub.f32 %v860, %v902
    %v927 = vsub.f32 %v861, %v905
    %v928 = vsub.f32 %v862, %v908
    %v929 = vsub.f32 %v863, %v911
    %v930 = vsub.f32 %v864, %v914
    %939 = vrot.lane.b32.xlu0 %v915, 127
    %v940 = vpop.permute.xlu0 %939
    %941 = vrot.lane.b32.xlu0 %v916, 127
    %v942 = vpop.permute.xlu0 %941
    %943 = vrot.lane.b32.xlu0 %v917, 127
    %v944 = vpop.permute.xlu0 %943
    %945 = vrot.lane.b32.xlu0 %v918, 127
    %v946 = vpop.permute.xlu0 %945
    %947 = vrot.lane.b32.xlu0 %v919, 127
    %v948 = vpop.permute.xlu0 %947
    %949 = vrot.lane.b32.xlu0 %v920, 127
    %v950 = vpop.permute.xlu0 %949
    %951 = vrot.lane.b32.xlu0 %v921, 127
    %v952 = vpop.permute.xlu0 %951
    %953 = vrot.lane.b32.xlu0 %v922, 127
    %v954 = vpop.permute.xlu0 %953
    %971 = vrot.lane.b32.xlu0 %v923, 126
    %v972 = vpop.permute.xlu0 %971
    %973 = vrot.lane.b32.xlu0 %v924, 126
    %v974 = vpop.permute.xlu0 %973
    %975 = vrot.lane.b32.xlu0 %v925, 126
    %v976 = vpop.permute.xlu0 %975
    %977 = vrot.lane.b32.xlu0 %v926, 126
    %v978 = vpop.permute.xlu0 %977
    %979 = vrot.lane.b32.xlu0 %v927, 126
    %v980 = vpop.permute.xlu0 %979
    %981 = vrot.lane.b32.xlu0 %v928, 126
    %v982 = vpop.permute.xlu0 %981
    %983 = vrot.lane.b32.xlu0 %v929, 126
    %v984 = vpop.permute.xlu0 %983
    %985 = vrot.lane.b32.xlu0 %v930, 126
    %v986 = vpop.permute.xlu0 %985
    %vm995 = vcmask 23552
    %v996 = vsel %vm995, %v940, %v972
    %v997 = vsel %vm995, %v942, %v974
    %v998 = vsel %vm995, %v944, %v976
    %v999 = vsel %vm995, %v946, %v978
    %v1000 = vsel %vm995, %v948, %v980
    %v1001 = vsel %vm995, %v950, %v982
    %v1002 = vsel %vm995, %v952, %v984
    %v1003 = vsel %vm995, %v954, %v986
    %v1004 = vmul.f32 %v996, 1.442695
    %v1005 = vpow.pop %v1004
    %v1006 = vmul.f32 %v997, 1.442695
    %v1007 = vpow.pop %v1006
    %v1008 = vmul.f32 %v998, 1.442695
    %v1009 = vpow.pop %v1008
    %v1010 = vmul.f32 %v999, 1.442695
    %v1011 = vpow.pop %v1010
    %v1012 = vmul.f32 %v1000, 1.442695
    %v1013 = vpow.pop %v1012
    %v1014 = vmul.f32 %v1001, 1.442695
    %v1015 = vpow.pop %v1014
    %v1016 = vmul.f32 %v1002, 1.442695
    %v1017 = vpow.pop %v1016
    %v1018 = vmul.f32 %v1003, 1.442695
    %v1019 = vpow.pop %v1018
    %v1020 = vsel %vm995, %v1005, 0.0
    %1021 = vadd.xlane.f32.xlu0 %v1020
    %v1022 = vpop.xlane.xlu0 %1021
    %v1023 = vsel %vm995, %v1007, 0.0
    %1024 = vadd.xlane.f32.xlu0 %v1023
    %v1025 = vpop.xlane.xlu0 %1024
    %v1026 = vsel %vm995, %v1009, 0.0
    %1027 = vadd.xlane.f32.xlu0 %v1026
    %v1028 = vpop.xlane.xlu0 %1027
    %v1029 = vsel %vm995, %v1011, 0.0
    %1030 = vadd.xlane.f32.xlu0 %v1029
    %v1031 = vpop.xlane.xlu0 %1030
    %v1032 = vsel %vm995, %v1013, 0.0
    %1033 = vadd.xlane.f32.xlu0 %v1032
    %v1034 = vpop.xlane.xlu0 %1033
    %v1035 = vsel %vm995, %v1015, 0.0
    %1036 = vadd.xlane.f32.xlu0 %v1035
    %v1037 = vpop.xlane.xlu0 %1036
    %v1038 = vsel %vm995, %v1017, 0.0
    %1039 = vadd.xlane.f32.xlu0 %v1038
    %v1040 = vpop.xlane.xlu0 %1039
    %v1041 = vsel %vm995, %v1019, 0.0
    %1042 = vadd.xlane.f32.xlu0 %v1041
    %v1043 = vpop.xlane.xlu0 %1042
    %1052 = vrot.lane.b32.xlu0 %v1005, 125
    %v1053 = vpop.permute.xlu0 %1052
    %1054 = vrot.lane.b32.xlu0 %v1007, 125
    %v1055 = vpop.permute.xlu0 %1054
    %1056 = vrot.lane.b32.xlu0 %v1009, 125
    %v1057 = vpop.permute.xlu0 %1056
    %1058 = vrot.lane.b32.xlu0 %v1011, 125
    %v1059 = vpop.permute.xlu0 %1058
    %1060 = vrot.lane.b32.xlu0 %v1013, 125
    %v1061 = vpop.permute.xlu0 %1060
    %1062 = vrot.lane.b32.xlu0 %v1015, 125
    %v1063 = vpop.permute.xlu0 %1062
    %1064 = vrot.lane.b32.xlu0 %v1017, 125
    %v1065 = vpop.permute.xlu0 %1064
    %1066 = vrot.lane.b32.xlu0 %v1019, 125
    %v1067 = vpop.permute.xlu0 %1066
    %v1076 = vsel %vm995, %v1053, 0.0
    %1077 = vadd.xlane.f32.xlu0 %v1076
    %v1078 = vpop.xlane.xlu0 %1077
    %v1079 = vsel %vm995, %v1055, 0.0
    %1080 = vadd.xlane.f32.xlu0 %v1079
    %v1081 = vpop.xlane.xlu0 %1080
    %v1082 = vsel %vm995, %v1057, 0.0
    %1083 = vadd.xlane.f32.xlu0 %v1082
    %v1084 = vpop.xlane.xlu0 %1083
    %v1085 = vsel %vm995, %v1059, 0.0
    %1086 = vadd.xlane.f32.xlu0 %v1085
    %v1087 = vpop.xlane.xlu0 %1086
    %v1088 = vsel %vm995, %v1061, 0.0
    %1089 = vadd.xlane.f32.xlu0 %v1088
    %v1090 = vpop.xlane.xlu0 %1089
    %v1091 = vsel %vm995, %v1063, 0.0
    %1092 = vadd.xlane.f32.xlu0 %v1091
    %v1093 = vpop.xlane.xlu0 %1092
    %v1094 = vsel %vm995, %v1065, 0.0
    %1095 = vadd.xlane.f32.xlu0 %v1094
    %v1096 = vpop.xlane.xlu0 %1095
    %v1097 = vsel %vm995, %v1067, 0.0
    %1098 = vadd.xlane.f32.xlu0 %v1097
    %v1099 = vpop.xlane.xlu0 %1098
    %vm1100 = vcmask 7168
    %v1101 = vsel %vm1100, %v1022, %v1078
    %v1102 = vsel %vm1100, %v1025, %v1081
    %v1103 = vsel %vm1100, %v1028, %v1084
    %v1104 = vsel %vm1100, %v1031, %v1087
    %v1105 = vsel %vm1100, %v1034, %v1090
    %v1106 = vsel %vm1100, %v1037, %v1093
    %v1107 = vsel %vm1100, %v1040, %v1096
    %v1108 = vsel %vm1100, %v1043, %v1099
    %v1109 = vrcp.pop %v1101
    %v1110 = vrcp.pop %v1102
    %v1111 = vrcp.pop %v1103
    %v1112 = vrcp.pop %v1104
    %v1113 = vrcp.pop %v1105
    %v1114 = vrcp.pop %v1106
    %v1115 = vrcp.pop %v1107
    %v1116 = vrcp.pop %v1108
    %1118 = vset.pattern.permute.xlu0 0
    %1119 = vperm.xlu0 %1118, %v1109
    %v1120 = vpop.permute.xlu0 %1119
    %1123 = vset.pattern.permute.xlu0 0
    %1124 = vperm.xlu0 %1123, %v1110
    %v1125 = vpop.permute.xlu0 %1124
    %1128 = vset.pattern.permute.xlu0 0
    %1129 = vperm.xlu0 %1128, %v1111
    %v1130 = vpop.permute.xlu0 %1129
    %1133 = vset.pattern.permute.xlu0 0
    %1134 = vperm.xlu0 %1133, %v1112
    %v1135 = vpop.permute.xlu0 %1134
    %1138 = vset.pattern.permute.xlu0 0
    %1139 = vperm.xlu0 %1138, %v1113
    %v1140 = vpop.permute.xlu0 %1139
    %1143 = vset.pattern.permute.xlu0 0
    %1144 = vperm.xlu0 %1143, %v1114
    %v1145 = vpop.permute.xlu0 %1144
    %1148 = vset.pattern.permute.xlu0 0
    %1149 = vperm.xlu0 %1148, %v1115
    %v1150 = vpop.permute.xlu0 %1149
    %1153 = vset.pattern.permute.xlu0 0
    %1154 = vperm.xlu0 %1153, %v1116
    %v1155 = vpop.permute.xlu0 %1154
    %v1157 = vmul.f32 %v1005, %v1120
    %v1158 = vmul.f32 %v1007, %v1125
    %v1159 = vmul.f32 %v1009, %v1130
    %v1160 = vmul.f32 %v1011, %v1135
    %v1161 = vmul.f32 %v1013, %v1140
    %v1162 = vmul.f32 %v1015, %v1145
    %v1163 = vmul.f32 %v1017, %v1150
    %v1164 = vmul.f32 %v1019, %v1155
    %1165 = vset.pattern.permute.xlu0 1
    %1166 = vperm.xlu0 %1165, %v1109
    %v1167 = vpop.permute.xlu0 %1166
    %1169 = vset.pattern.permute.xlu0 1
    %1170 = vperm.xlu0 %1169, %v1110
    %v1171 = vpop.permute.xlu0 %1170
    %1173 = vset.pattern.permute.xlu0 1
    %1174 = vperm.xlu0 %1173, %v1111
    %v1175 = vpop.permute.xlu0 %1174
    %1177 = vset.pattern.permute.xlu0 1
    %1178 = vperm.xlu0 %1177, %v1112
    %v1179 = vpop.permute.xlu0 %1178
    %1181 = vset.pattern.permute.xlu0 1
    %1182 = vperm.xlu0 %1181, %v1113
    %v1183 = vpop.permute.xlu0 %1182
    %1185 = vset.pattern.permute.xlu0 1
    %1186 = vperm.xlu0 %1185, %v1114
    %v1187 = vpop.permute.xlu0 %1186
    %1189 = vset.pattern.permute.xlu0 1
    %1190 = vperm.xlu0 %1189, %v1115
    %v1191 = vpop.permute.xlu0 %1190
    %1193 = vset.pattern.permute.xlu0 1
    %1194 = vperm.xlu0 %1193, %v1116
    %v1195 = vpop.permute.xlu0 %1194
    %v1197 = vmul.f32 %v1005, %v1167
    %v1198 = vmul.f32 %v1007, %v1171
    %v1199 = vmul.f32 %v1009, %v1175
    %v1200 = vmul.f32 %v1011, %v1179
    %v1201 = vmul.f32 %v1013, %v1183
    %v1202 = vmul.f32 %v1015, %v1187
    %v1203 = vmul.f32 %v1017, %v1191
    %v1204 = vmul.f32 %v1019, %v1195
    %v1205 = vsel %vm995, %v1157, %v1197
    %v1206 = vsel %vm995, %v1158, %v1198
    %v1207 = vsel %vm995, %v1159, %v1199
    %v1208 = vsel %vm995, %v1160, %v1200
    %v1209 = vsel %vm995, %v1161, %v1201
    %v1210 = vsel %vm995, %v1162, %v1202
    %v1211 = vsel %vm995, %v1163, %v1203
    %v1212 = vsel %vm995, %v1164, %v1204
    %v1213 = vld [vmem:[%s7] sm:$0x3f]
    %v1214 = vld [vmem:[%s7 + $0x8] sm:$0x3f]
    %vm1215 = vcmask 48128
    %v1217 = vsel %vm1215, %v1205, 0
    %v1220 = vsel %vm1215, %v1206, 0
    %v1223 = vsel %vm1215, %v1207, 0
    %v1226 = vsel %vm1215, %v1208, 0
    %v1229 = vsel %vm1215, %v1209, 0
    %v1232 = vsel %vm1215, %v1210, 0
    %v1235 = vsel %vm1215, %v1211, 0
    %v1238 = vsel %vm1215, %v1212, 0
    %vm1240 = vcmask 1045504
    %v1242 = vsel %vm1240, %v1213, 0
    %v1245 = vsel %vm1240, %v1214, 0
    %1247 = vmatpush.msra.mxu0 0.0
    %1248 = vmatpush.msra.mxu0 0.0
    %1249 = vmatpush.msra.mxu0 0.0
    %1250 = vmatpush.msra.mxu0 0.0
    %1251 = vmatpush.msra.mxu0 0.0
    %1252 = vmatpush.msra.mxu0 0.0
    %1253 = vmatpush.msra.mxu0 0.0
    %1254 = vmatpush.msra.mxu0 0.0
    %1255 = vmatpush.msra.mxu0 0.0
    %1256 = vmatpush.msra.mxu0 0.0
    %1257 = vmatpush.msra.mxu0 0.0
    %1258 = vmatpush.msra.mxu0 0.0
    %1259 = vmatpush.msra.mxu0 0.0
    %1260 = vmatpush.msra.mxu0 0.0
    %1261 = vmatpush.msra.mxu0 0.0
    %1262 = vmatpush.msra.mxu0 %v1242
    %1263 = vmatmul.f32.gmra.mxu0 %v1217
    %v1264 = vpop.f32.mrf.mxu0
    %v1265 = vadd.f32 0.0, %v1264
    %1266 = vmatmul.f32.gmra.mxu0 %v1220
    %v1267 = vpop.f32.mrf.mxu0
    %v1268 = vadd.f32 0.0, %v1267
    %1269 = vmatmul.f32.gmra.mxu0 %v1223
    %v1270 = vpop.f32.mrf.mxu0
    %v1271 = vadd.f32 0.0, %v1270
    %1272 = vmatmul.f32.gmra.mxu0 %v1226
    %v1273 = vpop.f32.mrf.mxu0
    %v1274 = vadd.f32 0.0, %v1273
    %1275 = vmatmul.f32.gmra.mxu0 %v1229
    %v1276 = vpop.f32.mrf.mxu0
    %v1277 = vadd.f32 0.0, %v1276
    %1278 = vmatmul.f32.gmra.mxu0 %v1232
    %v1279 = vpop.f32.mrf.mxu0
    %v1280 = vadd.f32 0.0, %v1279
    %1281 = vmatmul.f32.gmra.mxu0 %v1235
    %v1282 = vpop.f32.mrf.mxu0
    %v1283 = vadd.f32 0.0, %v1282
    %1284 = vmatmul.f32.gmra.mxu0 %v1238
    %v1285 = vpop.f32.mrf.mxu0
    %v1286 = vadd.f32 0.0, %v1285
    %1287 = vdwg.mxu0
    %1288 = vmatpush.msra.mxu0 0.0
    %1289 = vmatpush.msra.mxu0 0.0
    %1290 = vmatpush.msra.mxu0 0.0
    %1291 = vmatpush.msra.mxu0 0.0
    %1292 = vmatpush.msra.mxu0 0.0
    %1293 = vmatpush.msra.mxu0 0.0
    %1294 = vmatpush.msra.mxu0 0.0
    %1295 = vmatpush.msra.mxu0 0.0
    %1296 = vmatpush.msra.mxu0 0.0
    %1297 = vmatpush.msra.mxu0 0.0
    %1298 = vmatpush.msra.mxu0 0.0
    %1299 = vmatpush.msra.mxu0 0.0
    %1300 = vmatpush.msra.mxu0 0.0
    %1301 = vmatpush.msra.mxu0 0.0
    %1302 = vmatpush.msra.mxu0 0.0
    %1303 = vmatpush.msra.mxu0 %v1245
    %1304 = vmatmul.f32.gmra.mxu0 %v1217
    %v1305 = vpop.f32.mrf.mxu0
    %v1306 = vadd.f32 0.0, %v1305
    %1307 = vmatmul.f32.gmra.mxu0 %v1220
    %v1308 = vpop.f32.mrf.mxu0
    %v1309 = vadd.f32 0.0, %v1308
    %1310 = vmatmul.f32.gmra.mxu0 %v1223
    %v1311 = vpop.f32.mrf.mxu0
    %v1312 = vadd.f32 0.0, %v1311
    %1313 = vmatmul.f32.gmra.mxu0 %v1226
    %v1314 = vpop.f32.mrf.mxu0
    %v1315 = vadd.f32 0.0, %v1314
    %1316 = vmatmul.f32.gmra.mxu0 %v1229
    %v1317 = vpop.f32.mrf.mxu0
    %v1318 = vadd.f32 0.0, %v1317
    %1319 = vmatmul.f32.gmra.mxu0 %v1232
    %v1320 = vpop.f32.mrf.mxu0
    %v1321 = vadd.f32 0.0, %v1320
    %1322 = vmatmul.f32.gmra.mxu0 %v1235
    %v1323 = vpop.f32.mrf.mxu0
    %v1324 = vadd.f32 0.0, %v1323
    %1325 = vmatmul.f32.gmra.mxu0 %v1238
    %v1326 = vpop.f32.mrf.mxu0
    %v1327 = vadd.f32 0.0, %v1326
    %1328 = vdwg.mxu0
    %1345 = vrot.lane.b32.xlu0 %v559, 96
    %v1346 = vpop.permute.xlu0 %1345
    %1347 = vrot.lane.b32.xlu0 %v560, 96
    %v1348 = vpop.permute.xlu0 %1347
    %1349 = vrot.lane.b32.xlu0 %v561, 96
    %v1350 = vpop.permute.xlu0 %1349
    %1351 = vrot.lane.b32.xlu0 %v562, 96
    %v1352 = vpop.permute.xlu0 %1351
    %1353 = vrot.lane.b32.xlu0 %v563, 96
    %v1354 = vpop.permute.xlu0 %1353
    %1355 = vrot.lane.b32.xlu0 %v564, 96
    %v1356 = vpop.permute.xlu0 %1355
    %1357 = vrot.lane.b32.xlu0 %v565, 96
    %v1358 = vpop.permute.xlu0 %1357
    %1359 = vrot.lane.b32.xlu0 %v566, 96
    %v1360 = vpop.permute.xlu0 %1359
    %1361 = vrot.lane.b32.xlu0 %v567, 96
    %v1362 = vpop.permute.xlu0 %1361
    %1363 = vrot.lane.b32.xlu0 %v568, 96
    %v1364 = vpop.permute.xlu0 %1363
    %1365 = vrot.lane.b32.xlu0 %v569, 96
    %v1366 = vpop.permute.xlu0 %1365
    %1367 = vrot.lane.b32.xlu0 %v570, 96
    %v1368 = vpop.permute.xlu0 %1367
    %1369 = vrot.lane.b32.xlu0 %v571, 96
    %v1370 = vpop.permute.xlu0 %1369
    %1371 = vrot.lane.b32.xlu0 %v572, 96
    %v1372 = vpop.permute.xlu0 %1371
    %1373 = vrot.lane.b32.xlu0 %v573, 96
    %v1374 = vpop.permute.xlu0 %1373
    %1375 = vrot.lane.b32.xlu0 %v574, 96
    %v1376 = vpop.permute.xlu0 %1375
    %v1377 = vsel %vm386, %v1346, %v1348
    %v1378 = vsel %vm386, %v1350, %v1352
    %v1379 = vsel %vm386, %v1354, %v1356
    %v1380 = vsel %vm386, %v1358, %v1360
    %v1381 = vsel %vm386, %v1362, %v1364
    %v1382 = vsel %vm386, %v1366, %v1368
    %v1383 = vsel %vm386, %v1370, %v1372
    %v1384 = vsel %vm386, %v1374, %v1376
    %v1401 = vmul.f32 %v1265, %v1377
    %v1402 = vmul.f32 %v1306, %v1348
    %v1403 = vmul.f32 %v1268, %v1378
    %v1404 = vmul.f32 %v1309, %v1352
    %v1405 = vmul.f32 %v1271, %v1379
    %v1406 = vmul.f32 %v1312, %v1356
    %v1407 = vmul.f32 %v1274, %v1380
    %v1408 = vmul.f32 %v1315, %v1360
    %v1409 = vmul.f32 %v1277, %v1381
    %v1410 = vmul.f32 %v1318, %v1364
    %v1411 = vmul.f32 %v1280, %v1382
    %v1412 = vmul.f32 %v1321, %v1368
    %v1413 = vmul.f32 %v1283, %v1383
    %v1414 = vmul.f32 %v1324, %v1372
    %v1415 = vmul.f32 %v1286, %v1384
    %v1416 = vmul.f32 %v1327, %v1376
    %1425 = vrot.lane.b32.xlu0 %v1401, 96
    %v1426 = vpop.permute.xlu0 %1425
    %1427 = vrot.lane.b32.xlu0 %v1403, 96
    %v1428 = vpop.permute.xlu0 %1427
    %1429 = vrot.lane.b32.xlu0 %v1405, 96
    %v1430 = vpop.permute.xlu0 %1429
    %1431 = vrot.lane.b32.xlu0 %v1407, 96
    %v1432 = vpop.permute.xlu0 %1431
    %1433 = vrot.lane.b32.xlu0 %v1409, 96
    %v1434 = vpop.permute.xlu0 %1433
    %1435 = vrot.lane.b32.xlu0 %v1411, 96
    %v1436 = vpop.permute.xlu0 %1435
    %1437 = vrot.lane.b32.xlu0 %v1413, 96
    %v1438 = vpop.permute.xlu0 %1437
    %1439 = vrot.lane.b32.xlu0 %v1415, 96
    %v1440 = vpop.permute.xlu0 %1439
    %v1449 = vadd.f32 %v1401, %v1426
    %v1450 = vadd.f32 %v1403, %v1428
    %v1451 = vadd.f32 %v1405, %v1430
    %v1452 = vadd.f32 %v1407, %v1432
    %v1453 = vadd.f32 %v1409, %v1434
    %v1454 = vadd.f32 %v1411, %v1436
    %v1455 = vadd.f32 %v1413, %v1438
    %v1456 = vadd.f32 %v1415, %v1440
    %1457 = vrot.lane.b32.xlu0 %v1401, 64
    %v1458 = vpop.permute.xlu0 %1457
    %1459 = vrot.lane.b32.xlu0 %v1403, 64
    %v1460 = vpop.permute.xlu0 %1459
    %1461 = vrot.lane.b32.xlu0 %v1405, 64
    %v1462 = vpop.permute.xlu0 %1461
    %1463 = vrot.lane.b32.xlu0 %v1407, 64
    %v1464 = vpop.permute.xlu0 %1463
    %1465 = vrot.lane.b32.xlu0 %v1409, 64
    %v1466 = vpop.permute.xlu0 %1465
    %1467 = vrot.lane.b32.xlu0 %v1411, 64
    %v1468 = vpop.permute.xlu0 %1467
    %1469 = vrot.lane.b32.xlu0 %v1413, 64
    %v1470 = vpop.permute.xlu0 %1469
    %1471 = vrot.lane.b32.xlu0 %v1415, 64
    %v1472 = vpop.permute.xlu0 %1471
    %v1481 = vadd.f32 %v1449, %v1458
    %v1482 = vadd.f32 %v1450, %v1460
    %v1483 = vadd.f32 %v1451, %v1462
    %v1484 = vadd.f32 %v1452, %v1464
    %v1485 = vadd.f32 %v1453, %v1466
    %v1486 = vadd.f32 %v1454, %v1468
    %v1487 = vadd.f32 %v1455, %v1470
    %v1488 = vadd.f32 %v1456, %v1472
    %1489 = vrot.lane.b32.xlu0 %v1401, 32
    %v1490 = vpop.permute.xlu0 %1489
    %1491 = vrot.lane.b32.xlu0 %v1403, 32
    %v1492 = vpop.permute.xlu0 %1491
    %1493 = vrot.lane.b32.xlu0 %v1405, 32
    %v1494 = vpop.permute.xlu0 %1493
    %1495 = vrot.lane.b32.xlu0 %v1407, 32
    %v1496 = vpop.permute.xlu0 %1495
    %1497 = vrot.lane.b32.xlu0 %v1409, 32
    %v1498 = vpop.permute.xlu0 %1497
    %1499 = vrot.lane.b32.xlu0 %v1411, 32
    %v1500 = vpop.permute.xlu0 %1499
    %1501 = vrot.lane.b32.xlu0 %v1413, 32
    %v1502 = vpop.permute.xlu0 %1501
    %1503 = vrot.lane.b32.xlu0 %v1415, 32
    %v1504 = vpop.permute.xlu0 %1503
    %v1513 = vadd.f32 %v1481, %v1490
    %v1514 = vadd.f32 %v1482, %v1492
    %v1515 = vadd.f32 %v1483, %v1494
    %v1516 = vadd.f32 %v1484, %v1496
    %v1517 = vadd.f32 %v1485, %v1498
    %v1518 = vadd.f32 %v1486, %v1500
    %v1519 = vadd.f32 %v1487, %v1502
    %v1520 = vadd.f32 %v1488, %v1504
    %v1521 = vadd.f32 %v1513, %v1402
    %v1522 = vadd.f32 %v1514, %v1404
    %v1523 = vadd.f32 %v1515, %v1406
    %v1524 = vadd.f32 %v1516, %v1408
    %v1525 = vadd.f32 %v1517, %v1410
    %v1526 = vadd.f32 %v1518, %v1412
    %v1527 = vadd.f32 %v1519, %v1414
    %v1528 = vadd.f32 %v1520, %v1416
    %1537 = vrot.lane.b32.xlu0 %v1402, 96
    %v1538 = vpop.permute.xlu0 %1537
    %1539 = vrot.lane.b32.xlu0 %v1404, 96
    %v1540 = vpop.permute.xlu0 %1539
    %1541 = vrot.lane.b32.xlu0 %v1406, 96
    %v1542 = vpop.permute.xlu0 %1541
    %1543 = vrot.lane.b32.xlu0 %v1408, 96
    %v1544 = vpop.permute.xlu0 %1543
    %1545 = vrot.lane.b32.xlu0 %v1410, 96
    %v1546 = vpop.permute.xlu0 %1545
    %1547 = vrot.lane.b32.xlu0 %v1412, 96
    %v1548 = vpop.permute.xlu0 %1547
    %1549 = vrot.lane.b32.xlu0 %v1414, 96
    %v1550 = vpop.permute.xlu0 %1549
    %1551 = vrot.lane.b32.xlu0 %v1416, 96
    %v1552 = vpop.permute.xlu0 %1551
    %v1561 = vadd.f32 %v1521, %v1538
    %v1562 = vadd.f32 %v1522, %v1540
    %v1563 = vadd.f32 %v1523, %v1542
    %v1564 = vadd.f32 %v1524, %v1544
    %v1565 = vadd.f32 %v1525, %v1546
    %v1566 = vadd.f32 %v1526, %v1548
    %v1567 = vadd.f32 %v1527, %v1550
    %v1568 = vadd.f32 %v1528, %v1552
    %v1569 = vadd.f32 %v250, %v1561
    %v1570 = vadd.f32 %v253, %v1562
    %v1571 = vadd.f32 %v256, %v1563
    %v1572 = vadd.f32 %v259, %v1564
    %v1573 = vadd.f32 %v262, %v1565
    %v1574 = vadd.f32 %v265, %v1566
    %v1575 = vadd.f32 %v268, %v1567
    %v1576 = vadd.f32 %v271, %v1568
    %v1577 = vpack.c.bf16 %v1570, %v1569
    %v1578 = vpack.c.bf16 %v1572, %v1571
    %v1579 = vpack.c.bf16 %v1574, %v1573
    %v1580 = vpack.c.bf16 %v1576, %v1575
    %v1581 = vld [vmem:[%s5] sm:$0xf]
    %v1582 = vld [vmem:[%s5 + $0x4] sm:$0xf]
    %v1583 = vld [vmem:[%s5 + $0x8] sm:$0xf]
    %v1584 = vld [vmem:[%s5 + $0xc] sm:$0xf]
    %v1585 = vld [vmem:[%s6] sm:$0x1]
    %v1587 = vperm.slane %v1585, 0
    %v1593 = vunpack.c.l.b16 %v1581
    %v1594 = vunpack.c.l.b16 %v1582
    %v1595 = vunpack.c.l.b16 %v1583
    %v1596 = vunpack.c.l.b16 %v1584
    %v1597 = vpack.c.b16 %v1594, %v1593
    %v1598 = vpack.c.b16 %v1596, %v1595
    %v1602 = vsel %vm369, %v1577, 0
    %v1605 = vsel %vm369, %v1578, 0
    %v1608 = vsel %vm369, %v1579, 0
    %v1611 = vsel %vm369, %v1580, 0
    %1613 = vmatpush.bf16.msra.mxu0 0
    %1614 = vmatpush.bf16.msra.mxu0 0
    %1615 = vmatpush.bf16.msra.mxu0 0
    %1616 = vmatpush.bf16.msra.mxu0 0
    %1617 = vmatpush.bf16.msra.mxu0 0
    %1618 = vmatpush.bf16.msra.mxu0 0
    %1619 = vmatpush.bf16.msra.mxu0 %v1598
    %1620 = vmatpush.bf16.msra.mxu0 %v1597
    %1621 = vmatmul.bf16.gmra.mxu0 %v1602
    %v1622 = vpop.f32.mrf.mxu0
    %v1623 = vadd.f32 %v1587, %v1622
    %v1624 = vpop.f32.mrf.mxu0
    %v1625 = vadd.f32 %v1587, %v1624
    %1626 = vmatmul.bf16.gmra.mxu0 %v1605
    %v1627 = vpop.f32.mrf.mxu0
    %v1628 = vadd.f32 %v1587, %v1627
    %v1629 = vpop.f32.mrf.mxu0
    %v1630 = vadd.f32 %v1587, %v1629
    %1631 = vmatmul.bf16.gmra.mxu0 %v1608
    %v1632 = vpop.f32.mrf.mxu0
    %v1633 = vadd.f32 %v1587, %v1632
    %v1634 = vpop.f32.mrf.mxu0
    %v1635 = vadd.f32 %v1587, %v1634
    %1636 = vmatmul.bf16.gmra.mxu0 %v1611
    %v1637 = vpop.f32.mrf.mxu0
    %v1638 = vadd.f32 %v1587, %v1637
    %v1639 = vpop.f32.mrf.mxu0
    %v1640 = vadd.f32 %v1587, %v1639
    %1641 = vdwg.mxu0
    %1642 = vst.msk [vmem:[%s8] sm:$0xff] %vm369, %v1623
    %1643 = vst.msk [vmem:[%s8 + $0x8] sm:$0xff] %vm369, %v1625
    %1644 = vst.msk [vmem:[%s8 + $0x10] sm:$0xff] %vm369, %v1628
    %1645 = vst.msk [vmem:[%s8 + $0x18] sm:$0xff] %vm369, %v1630
    %1646 = vst.msk [vmem:[%s8 + $0x20] sm:$0xff] %vm369, %v1633
    %1647 = vst.msk [vmem:[%s8 + $0x28] sm:$0xff] %vm369, %v1635
    %1648 = vst.msk [vmem:[%s8 + $0x30] sm:$0xff] %vm369, %v1638
    %1649 = vst.msk [vmem:[%s8 + $0x38] sm:$0xff] %vm369, %v1640
    // Predicated region
    $region38: #{hybrid_conv_forward.1} parent=1 // pred_check
      _
    $region39: #{hybrid_conv_forward.1} parent=1 // pred_check_branch
      %1651 = sbr.rel (0) target = $region41
    $region40: #{hybrid_conv_forward.1} parent=1 // pred_region
      _
    $region41: #{hybrid_conv_forward.1} parent=1 // pred_fallthru
      _
    // Predicated region
    $region42: #{hybrid_conv_forward.1} parent=1 // pred_check
      _
    $region43: #{hybrid_conv_forward.1} parent=1 // pred_check_branch
      %1653 = sbr.rel (0) target = $region45
    $region44: #{hybrid_conv_forward.1} parent=1 // pred_region
      _
    $region45: #{hybrid_conv_forward.1} parent=1 // pred_fallthru
      _
    %1654 = vsyncpa [#allocation3], 1

</llo_original>
